<compile_context>
chip_gen: v6e
topology: v6e:2x2x1
jax: 0.10.0
libtpu: 0.0.40
codegen_flags: <defaults>
</compile_context>

<pallas_src>
import functools

import jax
import jax.numpy as jnp
import numpy as np
from jax.experimental import pallas as pl
from jax.experimental.pallas import tpu as pltpu

EPS = 1e-5        # PyTorch BatchNorm1d default eps
SUBLANES = 8      # contraction / tiny feature dims only need sublane alignment

_VMEM = pl.BlockSpec(memory_space=pltpu.MemorySpace.VMEM)


def _round_up(n, m):
    return ((n + m - 1) // m) * m


def _pad_to(a, shape):
    pads = [(0, t - s) for s, t in zip(a.shape, shape)]
    if all(p == (0, 0) for p in pads):
        return a
    return jnp.pad(a, pads)


# ------------------------------ fused kernel --------------------------------

def _fused_cascade_kernel(x_ref, w_enc_first_ref, w_hidden_ref, w_enc_last_ref,
                          w_phys_first_ref, w_phys_last_ref, bias_ref,
                          circuit_ref, phys_ref,
                          *, n_enc_hidden, n_phys_hidden):
    """Single-program fused forward of the whole Cascade_Net.

    Ref shapes (B = batch, H = hidden_dim, P = padded tail width):
      x_ref            (B, in_pad)       f32
      w_enc_first_ref  (in_pad, H)       bf16
      w_hidden_ref     (n_hidden, H, H)  bf16   encoder hidden layers, then phys
      w_enc_last_ref   (H, P)            bf16
      w_phys_first_ref (P, H)            bf16
      w_phys_last_ref  (H, P)            bf16
      bias_ref         (2, P)            f32    [enc-last bias, phys-last bias]
      circuit_ref      (B, P)            f32
      phys_ref         (B, P)            f32
    """
    inv_b = jnp.float32(1.0 / x_ref.shape[0])

    def dot(h, w):
        # bf16 x bf16 operands on the MXU, f32 accumulation.
        return jnp.dot(h.astype(jnp.bfloat16), w,
                       preferred_element_type=jnp.float32)

    def bn_relu(y):
        # Train-mode BatchNorm1d with gamma=1 / beta=0 folded away; the
        # preceding Linear bias is dropped in the wrapper (cancelled exactly by
        # the batch-mean subtraction).  Single-pass stats (var = E[y^2]-E[y]^2).
        # TODO(synk): switch to centered/two-pass stats if trained weights with
        # |mean| >> std, or eval-mode running stats, are ever loaded.
        mean = jnp.sum(y, axis=0, keepdims=True) * inv_b
        ex2 = jnp.sum(y * y, axis=0, keepdims=True) * inv_b
        var = jnp.maximum(ex2 - mean * mean, 0.0)
        scale = jax.lax.rsqrt(var + EPS)
        shift = -mean * scale
        return jnp.maximum(y * scale + shift, 0.0)

    biases = bias_ref[...]                                    # (2, P) f32

    # ------------------- shared_encoder (7 layers) --------------------------
    h = bn_relu(dot(x_ref[...], w_enc_first_ref[...]))
    for i in range(n_enc_hidden):                             # static unroll
        h = bn_relu(dot(h, w_hidden_ref[i]))
    circuit = dot(h, w_enc_last_ref[...]) + biases[0:1, :]
    circuit_ref[...] = circuit

    # ------------------- physical_params head (3 layers) --------------------
    h = bn_relu(dot(circuit, w_phys_first_ref[...]))
    for i in range(n_phys_hidden):
        h = bn_relu(dot(h, w_hidden_ref[n_enc_hidden + i]))
    phys_ref[...] = dot(h, w_phys_last_ref[...]) + biases[1:2, :]


# ----------------------------- parameter setup ------------------------------

def _init_linear(key, in_dim, out_dim):
    """PyTorch nn.Linear default init: U(-1/sqrt(fan_in), +1/sqrt(fan_in)).
    W is stored transposed as (in_dim, out_dim) so the hot path is x @ W."""
    k_w, k_b = jax.random.split(key)
    bound = 1.0 / float(np.sqrt(in_dim))
    w = jax.random.uniform(k_w, (in_dim, out_dim), jnp.float32, -bound, bound)
    b = jax.random.uniform(k_b, (out_dim,), jnp.float32, -bound, bound)
    return w, b


def init_fully_connected(key, in_dim, out_dim, hidden_dim, num_layers):
    """Matches FullyConnected(in, out, hidden, num_layers, last_relu=False, BN=True)."""
    assert num_layers >= 1
    layers = []
    cur = in_dim
    for i in range(num_layers):
        nxt = hidden_dim if i < num_layers - 1 else out_dim
        key, sub = jax.random.split(key)
        w, b = _init_linear(sub, cur, nxt)
        if i < num_layers - 1:
            gamma = jnp.ones((nxt,), jnp.float32)    # BN weight init
            beta = jnp.zeros((nxt,), jnp.float32)    # BN bias init
            layers.append(("bn_relu", (w, b, gamma, beta)))
        else:
            layers.append(("linear", (w, b)))
        cur = nxt
    return layers


# ------------------------------- forward ------------------------------------

def cascade_net_forward(x, enc_layers, phys_layers):
    """Fused Cascade_Net forward: one pallas_call for the whole network."""
    batch, in_dim = x.shape
    hidden_dim = enc_layers[0][1][0].shape[1]
    mid_dim = enc_layers[-1][1][0].shape[1]     # encoder out == physical in
    out_dim = phys_layers[-1][1][0].shape[1]

    in_pad = _round_up(in_dim, SUBLANES)
    tail_pad = _round_up(max(mid_dim, out_dim), SUBLANES)  # shared so biases stack

    # ---- pack / pad / bf16-cast parameters ---------------------------------
    enc_ws = [p[0] for _, p in enc_layers]
    phys_ws = [p[0] for _, p in phys_layers]
    n_enc_hidden = len(enc_ws) - 2
    n_phys_hidden = len(phys_ws) - 2
    assert n_enc_hidden + n_phys_hidden >= 1, "need a (H,H) hidden layer to stack"

    w_enc_first = _pad_to(enc_ws[0], (in_pad, hidden_dim)).astype(jnp.bfloat16)
    w_enc_last = _pad_to(enc_ws[-1], (hidden_dim, tail_pad)).astype(jnp.bfloat16)
    w_phys_first = _pad_to(phys_ws[0], (tail_pad, hidden_dim)).astype(jnp.bfloat16)
    w_phys_last = _pad_to(phys_ws[-1], (hidden_dim, tail_pad)).astype(jnp.bfloat16)
    w_hidden = jnp.stack(enc_ws[1:-1] + phys_ws[1:-1], axis=0).astype(jnp.bfloat16)

    # Only the two final Linear biases survive (biases before train-mode BN
    # cancel; fresh-module BN gamma/beta are identity).  Kept in f32.
    bias = jnp.stack([_pad_to(enc_layers[-1][1][1], (tail_pad,)),
                      _pad_to(phys_layers[-1][1][1], (tail_pad,))], axis=0)

    x_pad = _pad_to(x, (batch, in_pad))
    inputs = [x_pad, w_enc_first, w_hidden, w_enc_last,
              w_phys_first, w_phys_last, bias]

    # ---- advisory cost estimate --------------------------------------------
    dot_shapes = ([(in_pad, hidden_dim)]
                  + [(hidden_dim, hidden_dim)] * n_enc_hidden
                  + [(hidden_dim, tail_pad), (tail_pad, hidden_dim)]
                  + [(hidden_dim, hidden_dim)] * n_phys_hidden
                  + [(hidden_dim, tail_pad)])
    flops = int(sum(2 * batch * k * n for k, n in dot_shapes))
    transcendentals = int((n_enc_hidden + n_phys_hidden + 2) * hidden_dim)  # rsqrt/BN feat
    bytes_out = 2 * batch * tail_pad * 4
    bytes_accessed = int(sum(a.size * a.dtype.itemsize for a in inputs) + bytes_out)

    # ---- VMEM budget: resident params + activations + headroom --------------
    resident = bytes_accessed + 4 * batch * hidden_dim * 4
    vmem_limit = int(min(32 * 1024 * 1024, max(8 * 1024 * 1024, 4 * resident)))
    # TODO(synk): for hidden_dim >~ 1024 or large batch, stream weights from
    # memory_space=pl.ANY with a manual double-buffer (v7x has only 64 MiB
    # physical VMEM) and split batch over a 'parallel' grid axis with a
    # cross-core BN-stat reduction.

    fused = pl.pallas_call(
        functools.partial(_fused_cascade_kernel,
                          n_enc_hidden=n_enc_hidden,
                          n_phys_hidden=n_phys_hidden),
        out_shape=(jax.ShapeDtypeStruct((batch, tail_pad), jnp.float32),
                   jax.ShapeDtypeStruct((batch, tail_pad), jnp.float32)),
        in_specs=[_VMEM] * len(inputs),
        out_specs=(_VMEM, _VMEM),
        compiler_params=pltpu.CompilerParams(vmem_limit_bytes=vmem_limit),
        cost_estimate=pl.CostEstimate(flops=flops,
                                      transcendentals=transcendentals,
                                      bytes_accessed=bytes_accessed),
    )
    circuit_pad, phys_pad = fused(*inputs)
    return circuit_pad[:, :mid_dim], phys_pad[:, :out_dim]


# ------------------------- pure-JAX reference -------------------------------

def _reference_forward(x, enc_layers, phys_layers):
    """f32 reference of the exact PyTorch forward (train-mode BN, full biases)."""
    def fc(h, layers):
        for kind, p in layers:
            if kind == "bn_relu":
                w, b, gamma, beta = p
                y = jnp.dot(h, w, precision=jax.lax.Precision.HIGHEST) + b
                mean = jnp.mean(y, axis=0, keepdims=True)
                var = jnp.mean((y - mean) ** 2, axis=0, keepdims=True)
                y = (y - mean) * jax.lax.rsqrt(var + EPS) * gamma + beta
                h = jnp.maximum(y, 0.0)
            else:
                w, b = p
                h = jnp.dot(h, w, precision=jax.lax.Precision.HIGHEST) + b
        return h

    c = fc(x, enc_layers)
    return c, fc(c, phys_layers)


# -------------------------------- main ---------------------------------------

if __name__ == "__main__":
    key = jax.random.PRNGKey(0)
    k_x, k_enc, k_phys = jax.random.split(key, 3)

    batch = 8          # sublane-aligned small batch
    in_dim = 4         # Cascade_Net input dim
    mid_dim = 6        # shared_encoder out / physical_params in & out
    hidden_dim = 128   # small lane-aligned stand-in for the default 512

    x = jax.random.normal(k_x, (batch, in_dim), jnp.float32)

    # shared_encoder  = FullyConnected(4, 6, hidden_dim, 7, BN=True)
    enc_layers = init_fully_connected(k_enc, in_dim, mid_dim, hidden_dim, 7)
    # physical_params = FullyConnected(6, 6, hidden_dim, 3, BN=True)
    phys_layers = init_fully_connected(k_phys, mid_dim, mid_dim, hidden_dim, 3)

    circuit_params, physical_params = cascade_net_forward(x, enc_layers, phys_layers)
    jax.block_until_ready((circuit_params, physical_params))

    assert circuit_params.shape == (batch, mid_dim)
    assert physical_params.shape == (batch, mid_dim)
    assert circuit_params.dtype == jnp.float32
    assert physical_params.dtype == jnp.float32

    # Sanity check vs. a full-f32 reference.  Tolerance is loosened vs. the
    # previous f32-matmul kernel because matmul operands are now bf16 (f32
    # accumulation) across a 10-layer cascade.
    ref_c, ref_p = _reference_forward(x, enc_layers, phys_layers)
    np.testing.assert_allclose(np.asarray(circuit_params), np.asarray(ref_c),
                               rtol=5e-2, atol=5e-2)
    np.testing.assert_allclose(np.asarray(physical_params), np.asarray(ref_p),
                               rtol=5e-2, atol=5e-2)

    print("KERNEL_OK")
</pallas_src>

<mosaic_0001>
module attributes {stable_mosaic.version = 11 : i64} {
  func.func @_fused_cascade_kernel(%arg0: memref<8x8xf32, #tpu.memory_space<vmem>>, %arg1: memref<8x128xbf16, #tpu.memory_space<vmem>>, %arg2: memref<6x128x128xbf16, #tpu.memory_space<vmem>>, %arg3: memref<128x8xbf16, #tpu.memory_space<vmem>>, %arg4: memref<8x128xbf16, #tpu.memory_space<vmem>>, %arg5: memref<128x8xbf16, #tpu.memory_space<vmem>>, %arg6: memref<2x8xf32, #tpu.memory_space<vmem>>, %arg7: memref<8x8xf32, #tpu.memory_space<vmem>>, %arg8: memref<8x8xf32, #tpu.memory_space<vmem>>) attributes {dimension_semantics = [], scalar_prefetch = 0 : i64, scratch_operands = 0 : i64, tpu.core_type = #tpu.core_type<tc>} {
    %c0 = arith.constant 0 : index
    %c0_0 = arith.constant 0 : index
    %0 = vector.load %arg6[%c0, %c0_0] : memref<2x8xf32, #tpu.memory_space<vmem>>, vector<2x8xf32>
    %c0_1 = arith.constant 0 : index
    %c0_2 = arith.constant 0 : index
    %1 = vector.load %arg0[%c0_1, %c0_2] : memref<8x8xf32, #tpu.memory_space<vmem>>, vector<8x8xf32>
    %c0_3 = arith.constant 0 : index
    %c0_4 = arith.constant 0 : index
    %2 = vector.load %arg1[%c0_3, %c0_4] : memref<8x128xbf16, #tpu.memory_space<vmem>>, vector<8x128xbf16>
    %3 = arith.truncf %1 : vector<8x8xf32> to vector<8x8xbf16>
    %cst = arith.constant dense<0.000000e+00> : vector<8x128xf32>
    %4 = tpu.matmul %3, %2, %cst {dimension_numbers = #tpu.dot_dimension_numbers<[1], [0], [0], [1], [0, 0, 1, 1], [], []>} : vector<8x8xbf16>, vector<8x128xbf16>, vector<8x128xf32> -> vector<8x128xf32>
    %cst_5 = arith.constant dense<0.000000e+00> : vector<128xf32>
    %5 = vector.multi_reduction <add>, %4, %cst_5 [0] : vector<8x128xf32> to vector<128xf32>
    %6 = vector.shape_cast %5 : vector<128xf32> to vector<1x128xf32>
    %cst_6 = arith.constant 1.250000e-01 : f32
    %7 = vector.broadcast %cst_6 : f32 to vector<1x128xf32>
    %8 = arith.mulf %6, %7 : vector<1x128xf32>
    %9 = arith.mulf %4, %4 : vector<8x128xf32>
    %cst_7 = arith.constant dense<0.000000e+00> : vector<128xf32>
    %10 = vector.multi_reduction <add>, %9, %cst_7 [0] : vector<8x128xf32> to vector<128xf32>
    %11 = vector.shape_cast %10 : vector<128xf32> to vector<1x128xf32>
    %cst_8 = arith.constant 1.250000e-01 : f32
    %12 = vector.broadcast %cst_8 : f32 to vector<1x128xf32>
    %13 = arith.mulf %11, %12 : vector<1x128xf32>
    %14 = arith.mulf %8, %8 : vector<1x128xf32>
    %15 = arith.subf %13, %14 : vector<1x128xf32>
    %cst_9 = arith.constant 0.000000e+00 : f32
    %16 = vector.broadcast %cst_9 : f32 to vector<1x128xf32>
    %17 = arith.maximumf %15, %16 : vector<1x128xf32>
    %cst_10 = arith.constant 9.99999974E-6 : f32
    %18 = vector.broadcast %cst_10 : f32 to vector<1x128xf32>
    %19 = arith.addf %17, %18 : vector<1x128xf32>
    %20 = math.rsqrt %19 : vector<1x128xf32>
    %cst_11 = arith.constant 0.000000e+00 : f32
    %21 = vector.broadcast %cst_11 : f32 to vector<1x128xf32>
    %22 = arith.subf %21, %8 : vector<1x128xf32>
    %23 = arith.mulf %22, %20 : vector<1x128xf32>
    %24 = vector.broadcast %20 : vector<1x128xf32> to vector<8x128xf32>
    %25 = arith.mulf %4, %24 : vector<8x128xf32>
    %26 = vector.broadcast %23 : vector<1x128xf32> to vector<8x128xf32>
    %27 = arith.addf %25, %26 : vector<8x128xf32>
    %cst_12 = arith.constant 0.000000e+00 : f32
    %28 = vector.broadcast %cst_12 : f32 to vector<8x128xf32>
    %29 = arith.maximumf %27, %28 : vector<8x128xf32>
    %c0_13 = arith.constant 0 : index
    %c0_14 = arith.constant 0 : index
    %c0_15 = arith.constant 0 : index
    %30 = vector.load %arg2[%c0_13, %c0_14, %c0_15] : memref<6x128x128xbf16, #tpu.memory_space<vmem>>, vector<1x128x128xbf16>
    %31 = vector.shape_cast %30 : vector<1x128x128xbf16> to vector<128x128xbf16>
    %32 = arith.truncf %29 : vector<8x128xf32> to vector<8x128xbf16>
    %cst_16 = arith.constant dense<0.000000e+00> : vector<8x128xf32>
    %33 = tpu.matmul %32, %31, %cst_16 {dimension_numbers = #tpu.dot_dimension_numbers<[1], [0], [0], [1], [0, 0, 1, 1], [], []>} : vector<8x128xbf16>, vector<128x128xbf16>, vector<8x128xf32> -> vector<8x128xf32>
    %cst_17 = arith.constant dense<0.000000e+00> : vector<128xf32>
    %34 = vector.multi_reduction <add>, %33, %cst_17 [0] : vector<8x128xf32> to vector<128xf32>
    %35 = vector.shape_cast %34 : vector<128xf32> to vector<1x128xf32>
    %cst_18 = arith.constant 1.250000e-01 : f32
    %36 = vector.broadcast %cst_18 : f32 to vector<1x128xf32>
    %37 = arith.mulf %35, %36 : vector<1x128xf32>
    %38 = arith.mulf %33, %33 : vector<8x128xf32>
    %cst_19 = arith.constant dense<0.000000e+00> : vector<128xf32>
    %39 = vector.multi_reduction <add>, %38, %cst_19 [0] : vector<8x128xf32> to vector<128xf32>
    %40 = vector.shape_cast %39 : vector<128xf32> to vector<1x128xf32>
    %cst_20 = arith.constant 1.250000e-01 : f32
    %41 = vector.broadcast %cst_20 : f32 to vector<1x128xf32>
    %42 = arith.mulf %40, %41 : vector<1x128xf32>
    %43 = arith.mulf %37, %37 : vector<1x128xf32>
    %44 = arith.subf %42, %43 : vector<1x128xf32>
    %cst_21 = arith.constant 0.000000e+00 : f32
    %45 = vector.broadcast %cst_21 : f32 to vector<1x128xf32>
    %46 = arith.maximumf %44, %45 : vector<1x128xf32>
    %cst_22 = arith.constant 9.99999974E-6 : f32
    %47 = vector.broadcast %cst_22 : f32 to vector<1x128xf32>
    %48 = arith.addf %46, %47 : vector<1x128xf32>
    %49 = math.rsqrt %48 : vector<1x128xf32>
    %cst_23 = arith.constant 0.000000e+00 : f32
    %50 = vector.broadcast %cst_23 : f32 to vector<1x128xf32>
    %51 = arith.subf %50, %37 : vector<1x128xf32>
    %52 = arith.mulf %51, %49 : vector<1x128xf32>
    %53 = vector.broadcast %49 : vector<1x128xf32> to vector<8x128xf32>
    %54 = arith.mulf %33, %53 : vector<8x128xf32>
    %55 = vector.broadcast %52 : vector<1x128xf32> to vector<8x128xf32>
    %56 = arith.addf %54, %55 : vector<8x128xf32>
    %cst_24 = arith.constant 0.000000e+00 : f32
    %57 = vector.broadcast %cst_24 : f32 to vector<8x128xf32>
    %58 = arith.maximumf %56, %57 : vector<8x128xf32>
    %c1 = arith.constant 1 : index
    %c0_25 = arith.constant 0 : index
    %c0_26 = arith.constant 0 : index
    %59 = vector.load %arg2[%c1, %c0_25, %c0_26] : memref<6x128x128xbf16, #tpu.memory_space<vmem>>, vector<1x128x128xbf16>
    %60 = vector.shape_cast %59 : vector<1x128x128xbf16> to vector<128x128xbf16>
    %61 = arith.truncf %58 : vector<8x128xf32> to vector<8x128xbf16>
    %cst_27 = arith.constant dense<0.000000e+00> : vector<8x128xf32>
    %62 = tpu.matmul %61, %60, %cst_27 {dimension_numbers = #tpu.dot_dimension_numbers<[1], [0], [0], [1], [0, 0, 1, 1], [], []>} : vector<8x128xbf16>, vector<128x128xbf16>, vector<8x128xf32> -> vector<8x128xf32>
    %cst_28 = arith.constant dense<0.000000e+00> : vector<128xf32>
    %63 = vector.multi_reduction <add>, %62, %cst_28 [0] : vector<8x128xf32> to vector<128xf32>
    %64 = vector.shape_cast %63 : vector<128xf32> to vector<1x128xf32>
    %cst_29 = arith.constant 1.250000e-01 : f32
    %65 = vector.broadcast %cst_29 : f32 to vector<1x128xf32>
    %66 = arith.mulf %64, %65 : vector<1x128xf32>
    %67 = arith.mulf %62, %62 : vector<8x128xf32>
    %cst_30 = arith.constant dense<0.000000e+00> : vector<128xf32>
    %68 = vector.multi_reduction <add>, %67, %cst_30 [0] : vector<8x128xf32> to vector<128xf32>
    %69 = vector.shape_cast %68 : vector<128xf32> to vector<1x128xf32>
    %cst_31 = arith.constant 1.250000e-01 : f32
    %70 = vector.broadcast %cst_31 : f32 to vector<1x128xf32>
    %71 = arith.mulf %69, %70 : vector<1x128xf32>
    %72 = arith.mulf %66, %66 : vector<1x128xf32>
    %73 = arith.subf %71, %72 : vector<1x128xf32>
    %cst_32 = arith.constant 0.000000e+00 : f32
    %74 = vector.broadcast %cst_32 : f32 to vector<1x128xf32>
    %75 = arith.maximumf %73, %74 : vector<1x128xf32>
    %cst_33 = arith.constant 9.99999974E-6 : f32
    %76 = vector.broadcast %cst_33 : f32 to vector<1x128xf32>
    %77 = arith.addf %75, %76 : vector<1x128xf32>
    %78 = math.rsqrt %77 : vector<1x128xf32>
    %cst_34 = arith.constant 0.000000e+00 : f32
    %79 = vector.broadcast %cst_34 : f32 to vector<1x128xf32>
    %80 = arith.subf %79, %66 : vector<1x128xf32>
    %81 = arith.mulf %80, %78 : vector<1x128xf32>
    %82 = vector.broadcast %78 : vector<1x128xf32> to vector<8x128xf32>
    %83 = arith.mulf %62, %82 : vector<8x128xf32>
    %84 = vector.broadcast %81 : vector<1x128xf32> to vector<8x128xf32>
    %85 = arith.addf %83, %84 : vector<8x128xf32>
    %cst_35 = arith.constant 0.000000e+00 : f32
    %86 = vector.broadcast %cst_35 : f32 to vector<8x128xf32>
    %87 = arith.maximumf %85, %86 : vector<8x128xf32>
    %c2 = arith.constant 2 : index
    %c0_36 = arith.constant 0 : index
    %c0_37 = arith.constant 0 : index
    %88 = vector.load %arg2[%c2, %c0_36, %c0_37] : memref<6x128x128xbf16, #tpu.memory_space<vmem>>, vector<1x128x128xbf16>
    %89 = vector.shape_cast %88 : vector<1x128x128xbf16> to vector<128x128xbf16>
    %90 = arith.truncf %87 : vector<8x128xf32> to vector<8x128xbf16>
    %cst_38 = arith.constant dense<0.000000e+00> : vector<8x128xf32>
    %91 = tpu.matmul %90, %89, %cst_38 {dimension_numbers = #tpu.dot_dimension_numbers<[1], [0], [0], [1], [0, 0, 1, 1], [], []>} : vector<8x128xbf16>, vector<128x128xbf16>, vector<8x128xf32> -> vector<8x128xf32>
    %cst_39 = arith.constant dense<0.000000e+00> : vector<128xf32>
    %92 = vector.multi_reduction <add>, %91, %cst_39 [0] : vector<8x128xf32> to vector<128xf32>
    %93 = vector.shape_cast %92 : vector<128xf32> to vector<1x128xf32>
    %cst_40 = arith.constant 1.250000e-01 : f32
    %94 = vector.broadcast %cst_40 : f32 to vector<1x128xf32>
    %95 = arith.mulf %93, %94 : vector<1x128xf32>
    %96 = arith.mulf %91, %91 : vector<8x128xf32>
    %cst_41 = arith.constant dense<0.000000e+00> : vector<128xf32>
    %97 = vector.multi_reduction <add>, %96, %cst_41 [0] : vector<8x128xf32> to vector<128xf32>
    %98 = vector.shape_cast %97 : vector<128xf32> to vector<1x128xf32>
    %cst_42 = arith.constant 1.250000e-01 : f32
    %99 = vector.broadcast %cst_42 : f32 to vector<1x128xf32>
    %100 = arith.mulf %98, %99 : vector<1x128xf32>
    %101 = arith.mulf %95, %95 : vector<1x128xf32>
    %102 = arith.subf %100, %101 : vector<1x128xf32>
    %cst_43 = arith.constant 0.000000e+00 : f32
    %103 = vector.broadcast %cst_43 : f32 to vector<1x128xf32>
    %104 = arith.maximumf %102, %103 : vector<1x128xf32>
    %cst_44 = arith.constant 9.99999974E-6 : f32
    %105 = vector.broadcast %cst_44 : f32 to vector<1x128xf32>
    %106 = arith.addf %104, %105 : vector<1x128xf32>
    %107 = math.rsqrt %106 : vector<1x128xf32>
    %cst_45 = arith.constant 0.000000e+00 : f32
    %108 = vector.broadcast %cst_45 : f32 to vector<1x128xf32>
    %109 = arith.subf %108, %95 : vector<1x128xf32>
    %110 = arith.mulf %109, %107 : vector<1x128xf32>
    %111 = vector.broadcast %107 : vector<1x128xf32> to vector<8x128xf32>
    %112 = arith.mulf %91, %111 : vector<8x128xf32>
    %113 = vector.broadcast %110 : vector<1x128xf32> to vector<8x128xf32>
    %114 = arith.addf %112, %113 : vector<8x128xf32>
    %cst_46 = arith.constant 0.000000e+00 : f32
    %115 = vector.broadcast %cst_46 : f32 to vector<8x128xf32>
    %116 = arith.maximumf %114, %115 : vector<8x128xf32>
    %c3 = arith.constant 3 : index
    %c0_47 = arith.constant 0 : index
    %c0_48 = arith.constant 0 : index
    %117 = vector.load %arg2[%c3, %c0_47, %c0_48] : memref<6x128x128xbf16, #tpu.memory_space<vmem>>, vector<1x128x128xbf16>
    %118 = vector.shape_cast %117 : vector<1x128x128xbf16> to vector<128x128xbf16>
    %119 = arith.truncf %116 : vector<8x128xf32> to vector<8x128xbf16>
    %cst_49 = arith.constant dense<0.000000e+00> : vector<8x128xf32>
    %120 = tpu.matmul %119, %118, %cst_49 {dimension_numbers = #tpu.dot_dimension_numbers<[1], [0], [0], [1], [0, 0, 1, 1], [], []>} : vector<8x128xbf16>, vector<128x128xbf16>, vector<8x128xf32> -> vector<8x128xf32>
    %cst_50 = arith.constant dense<0.000000e+00> : vector<128xf32>
    %121 = vector.multi_reduction <add>, %120, %cst_50 [0] : vector<8x128xf32> to vector<128xf32>
    %122 = vector.shape_cast %121 : vector<128xf32> to vector<1x128xf32>
    %cst_51 = arith.constant 1.250000e-01 : f32
    %123 = vector.broadcast %cst_51 : f32 to vector<1x128xf32>
    %124 = arith.mulf %122, %123 : vector<1x128xf32>
    %125 = arith.mulf %120, %120 : vector<8x128xf32>
    %cst_52 = arith.constant dense<0.000000e+00> : vector<128xf32>
    %126 = vector.multi_reduction <add>, %125, %cst_52 [0] : vector<8x128xf32> to vector<128xf32>
    %127 = vector.shape_cast %126 : vector<128xf32> to vector<1x128xf32>
    %cst_53 = arith.constant 1.250000e-01 : f32
    %128 = vector.broadcast %cst_53 : f32 to vector<1x128xf32>
    %129 = arith.mulf %127, %128 : vector<1x128xf32>
    %130 = arith.mulf %124, %124 : vector<1x128xf32>
    %131 = arith.subf %129, %130 : vector<1x128xf32>
    %cst_54 = arith.constant 0.000000e+00 : f32
    %132 = vector.broadcast %cst_54 : f32 to vector<1x128xf32>
    %133 = arith.maximumf %131, %132 : vector<1x128xf32>
    %cst_55 = arith.constant 9.99999974E-6 : f32
    %134 = vector.broadcast %cst_55 : f32 to vector<1x128xf32>
    %135 = arith.addf %133, %134 : vector<1x128xf32>
    %136 = math.rsqrt %135 : vector<1x128xf32>
    %cst_56 = arith.constant 0.000000e+00 : f32
    %137 = vector.broadcast %cst_56 : f32 to vector<1x128xf32>
    %138 = arith.subf %137, %124 : vector<1x128xf32>
    %139 = arith.mulf %138, %136 : vector<1x128xf32>
    %140 = vector.broadcast %136 : vector<1x128xf32> to vector<8x128xf32>
    %141 = arith.mulf %120, %140 : vector<8x128xf32>
    %142 = vector.broadcast %139 : vector<1x128xf32> to vector<8x128xf32>
    %143 = arith.addf %141, %142 : vector<8x128xf32>
    %cst_57 = arith.constant 0.000000e+00 : f32
    %144 = vector.broadcast %cst_57 : f32 to vector<8x128xf32>
    %145 = arith.maximumf %143, %144 : vector<8x128xf32>
    %c4 = arith.constant 4 : index
    %c0_58 = arith.constant 0 : index
    %c0_59 = arith.constant 0 : index
    %146 = vector.load %arg2[%c4, %c0_58, %c0_59] : memref<6x128x128xbf16, #tpu.memory_space<vmem>>, vector<1x128x128xbf16>
    %147 = vector.shape_cast %146 : vector<1x128x128xbf16> to vector<128x128xbf16>
    %148 = arith.truncf %145 : vector<8x128xf32> to vector<8x128xbf16>
    %cst_60 = arith.constant dense<0.000000e+00> : vector<8x128xf32>
    %149 = tpu.matmul %148, %147, %cst_60 {dimension_numbers = #tpu.dot_dimension_numbers<[1], [0], [0], [1], [0, 0, 1, 1], [], []>} : vector<8x128xbf16>, vector<128x128xbf16>, vector<8x128xf32> -> vector<8x128xf32>
    %cst_61 = arith.constant dense<0.000000e+00> : vector<128xf32>
    %150 = vector.multi_reduction <add>, %149, %cst_61 [0] : vector<8x128xf32> to vector<128xf32>
    %151 = vector.shape_cast %150 : vector<128xf32> to vector<1x128xf32>
    %cst_62 = arith.constant 1.250000e-01 : f32
    %152 = vector.broadcast %cst_62 : f32 to vector<1x128xf32>
    %153 = arith.mulf %151, %152 : vector<1x128xf32>
    %154 = arith.mulf %149, %149 : vector<8x128xf32>
    %cst_63 = arith.constant dense<0.000000e+00> : vector<128xf32>
    %155 = vector.multi_reduction <add>, %154, %cst_63 [0] : vector<8x128xf32> to vector<128xf32>
    %156 = vector.shape_cast %155 : vector<128xf32> to vector<1x128xf32>
    %cst_64 = arith.constant 1.250000e-01 : f32
    %157 = vector.broadcast %cst_64 : f32 to vector<1x128xf32>
    %158 = arith.mulf %156, %157 : vector<1x128xf32>
    %159 = arith.mulf %153, %153 : vector<1x128xf32>
    %160 = arith.subf %158, %159 : vector<1x128xf32>
    %cst_65 = arith.constant 0.000000e+00 : f32
    %161 = vector.broadcast %cst_65 : f32 to vector<1x128xf32>
    %162 = arith.maximumf %160, %161 : vector<1x128xf32>
    %cst_66 = arith.constant 9.99999974E-6 : f32
    %163 = vector.broadcast %cst_66 : f32 to vector<1x128xf32>
    %164 = arith.addf %162, %163 : vector<1x128xf32>
    %165 = math.rsqrt %164 : vector<1x128xf32>
    %cst_67 = arith.constant 0.000000e+00 : f32
    %166 = vector.broadcast %cst_67 : f32 to vector<1x128xf32>
    %167 = arith.subf %166, %153 : vector<1x128xf32>
    %168 = arith.mulf %167, %165 : vector<1x128xf32>
    %169 = vector.broadcast %165 : vector<1x128xf32> to vector<8x128xf32>
    %170 = arith.mulf %149, %169 : vector<8x128xf32>
    %171 = vector.broadcast %168 : vector<1x128xf32> to vector<8x128xf32>
    %172 = arith.addf %170, %171 : vector<8x128xf32>
    %cst_68 = arith.constant 0.000000e+00 : f32
    %173 = vector.broadcast %cst_68 : f32 to vector<8x128xf32>
    %174 = arith.maximumf %172, %173 : vector<8x128xf32>
    %c0_69 = arith.constant 0 : index
    %c0_70 = arith.constant 0 : index
    %175 = vector.load %arg3[%c0_69, %c0_70] : memref<128x8xbf16, #tpu.memory_space<vmem>>, vector<128x8xbf16>
    %176 = arith.truncf %174 : vector<8x128xf32> to vector<8x128xbf16>
    %cst_71 = arith.constant dense<0.000000e+00> : vector<8x8xf32>
    %177 = tpu.matmul %176, %175, %cst_71 {dimension_numbers = #tpu.dot_dimension_numbers<[1], [0], [0], [1], [0, 0, 1, 1], [], []>} : vector<8x128xbf16>, vector<128x8xbf16>, vector<8x8xf32> -> vector<8x8xf32>
    %178 = vector.extract_strided_slice %0 {offsets = [0, 0], sizes = [1, 8], strides = [1, 1]} : vector<2x8xf32> to vector<1x8xf32>
    %179 = vector.broadcast %178 : vector<1x8xf32> to vector<8x8xf32>
    %180 = arith.addf %177, %179 : vector<8x8xf32>
    %c0_72 = arith.constant 0 : index
    %c0_73 = arith.constant 0 : index
    %181 = vector.load %arg7[%c0_72, %c0_73] : memref<8x8xf32, #tpu.memory_space<vmem>>, vector<8x8xf32>
    tpu.vector_store %arg7[%c0_72, %c0_73], %180 {strides = array<i32>} : memref<8x8xf32, #tpu.memory_space<vmem>>, vector<8x8xf32>,
    %c0_74 = arith.constant 0 : index
    %c0_75 = arith.constant 0 : index
    %182 = vector.load %arg4[%c0_74, %c0_75] : memref<8x128xbf16, #tpu.memory_space<vmem>>, vector<8x128xbf16>
    %183 = arith.truncf %180 : vector<8x8xf32> to vector<8x8xbf16>
    %cst_76 = arith.constant dense<0.000000e+00> : vector<8x128xf32>
    %184 = tpu.matmul %183, %182, %cst_76 {dimension_numbers = #tpu.dot_dimension_numbers<[1], [0], [0], [1], [0, 0, 1, 1], [], []>} : vector<8x8xbf16>, vector<8x128xbf16>, vector<8x128xf32> -> vector<8x128xf32>
    %cst_77 = arith.constant dense<0.000000e+00> : vector<128xf32>
    %185 = vector.multi_reduction <add>, %184, %cst_77 [0] : vector<8x128xf32> to vector<128xf32>
    %186 = vector.shape_cast %185 : vector<128xf32> to vector<1x128xf32>
    %cst_78 = arith.constant 1.250000e-01 : f32
    %187 = vector.broadcast %cst_78 : f32 to vector<1x128xf32>
    %188 = arith.mulf %186, %187 : vector<1x128xf32>
    %189 = arith.mulf %184, %184 : vector<8x128xf32>
    %cst_79 = arith.constant dense<0.000000e+00> : vector<128xf32>
    %190 = vector.multi_reduction <add>, %189, %cst_79 [0] : vector<8x128xf32> to vector<128xf32>
    %191 = vector.shape_cast %190 : vector<128xf32> to vector<1x128xf32>
    %cst_80 = arith.constant 1.250000e-01 : f32
    %192 = vector.broadcast %cst_80 : f32 to vector<1x128xf32>
    %193 = arith.mulf %191, %192 : vector<1x128xf32>
    %194 = arith.mulf %188, %188 : vector<1x128xf32>
    %195 = arith.subf %193, %194 : vector<1x128xf32>
    %cst_81 = arith.constant 0.000000e+00 : f32
    %196 = vector.broadcast %cst_81 : f32 to vector<1x128xf32>
    %197 = arith.maximumf %195, %196 : vector<1x128xf32>
    %cst_82 = arith.constant 9.99999974E-6 : f32
    %198 = vector.broadcast %cst_82 : f32 to vector<1x128xf32>
    %199 = arith.addf %197, %198 : vector<1x128xf32>
    %200 = math.rsqrt %199 : vector<1x128xf32>
    %cst_83 = arith.constant 0.000000e+00 : f32
    %201 = vector.broadcast %cst_83 : f32 to vector<1x128xf32>
    %202 = arith.subf %201, %188 : vector<1x128xf32>
    %203 = arith.mulf %202, %200 : vector<1x128xf32>
    %204 = vector.broadcast %200 : vector<1x128xf32> to vector<8x128xf32>
    %205 = arith.mulf %184, %204 : vector<8x128xf32>
    %206 = vector.broadcast %203 : vector<1x128xf32> to vector<8x128xf32>
    %207 = arith.addf %205, %206 : vector<8x128xf32>
    %cst_84 = arith.constant 0.000000e+00 : f32
    %208 = vector.broadcast %cst_84 : f32 to vector<8x128xf32>
    %209 = arith.maximumf %207, %208 : vector<8x128xf32>
    %c5 = arith.constant 5 : index
    %c0_85 = arith.constant 0 : index
    %c0_86 = arith.constant 0 : index
    %210 = vector.load %arg2[%c5, %c0_85, %c0_86] : memref<6x128x128xbf16, #tpu.memory_space<vmem>>, vector<1x128x128xbf16>
    %211 = vector.shape_cast %210 : vector<1x128x128xbf16> to vector<128x128xbf16>
    %212 = arith.truncf %209 : vector<8x128xf32> to vector<8x128xbf16>
    %cst_87 = arith.constant dense<0.000000e+00> : vector<8x128xf32>
    %213 = tpu.matmul %212, %211, %cst_87 {dimension_numbers = #tpu.dot_dimension_numbers<[1], [0], [0], [1], [0, 0, 1, 1], [], []>} : vector<8x128xbf16>, vector<128x128xbf16>, vector<8x128xf32> -> vector<8x128xf32>
    %cst_88 = arith.constant dense<0.000000e+00> : vector<128xf32>
    %214 = vector.multi_reduction <add>, %213, %cst_88 [0] : vector<8x128xf32> to vector<128xf32>
    %215 = vector.shape_cast %214 : vector<128xf32> to vector<1x128xf32>
    %cst_89 = arith.constant 1.250000e-01 : f32
    %216 = vector.broadcast %cst_89 : f32 to vector<1x128xf32>
    %217 = arith.mulf %215, %216 : vector<1x128xf32>
    %218 = arith.mulf %213, %213 : vector<8x128xf32>
    %cst_90 = arith.constant dense<0.000000e+00> : vector<128xf32>
    %219 = vector.multi_reduction <add>, %218, %cst_90 [0] : vector<8x128xf32> to vector<128xf32>
    %220 = vector.shape_cast %219 : vector<128xf32> to vector<1x128xf32>
    %cst_91 = arith.constant 1.250000e-01 : f32
    %221 = vector.broadcast %cst_91 : f32 to vector<1x128xf32>
    %222 = arith.mulf %220, %221 : vector<1x128xf32>
    %223 = arith.mulf %217, %217 : vector<1x128xf32>
    %224 = arith.subf %222, %223 : vector<1x128xf32>
    %cst_92 = arith.constant 0.000000e+00 : f32
    %225 = vector.broadcast %cst_92 : f32 to vector<1x128xf32>
    %226 = arith.maximumf %224, %225 : vector<1x128xf32>
    %cst_93 = arith.constant 9.99999974E-6 : f32
    %227 = vector.broadcast %cst_93 : f32 to vector<1x128xf32>
    %228 = arith.addf %226, %227 : vector<1x128xf32>
    %229 = math.rsqrt %228 : vector<1x128xf32>
    %cst_94 = arith.constant 0.000000e+00 : f32
    %230 = vector.broadcast %cst_94 : f32 to vector<1x128xf32>
    %231 = arith.subf %230, %217 : vector<1x128xf32>
    %232 = arith.mulf %231, %229 : vector<1x128xf32>
    %233 = vector.broadcast %229 : vector<1x128xf32> to vector<8x128xf32>
    %234 = arith.mulf %213, %233 : vector<8x128xf32>
    %235 = vector.broadcast %232 : vector<1x128xf32> to vector<8x128xf32>
    %236 = arith.addf %234, %235 : vector<8x128xf32>
    %cst_95 = arith.constant 0.000000e+00 : f32
    %237 = vector.broadcast %cst_95 : f32 to vector<8x128xf32>
    %238 = arith.maximumf %236, %237 : vector<8x128xf32>
    %c0_96 = arith.constant 0 : index
    %c0_97 = arith.constant 0 : index
    %239 = vector.load %arg5[%c0_96, %c0_97] : memref<128x8xbf16, #tpu.memory_space<vmem>>, vector<128x8xbf16>
    %240 = arith.truncf %238 : vector<8x128xf32> to vector<8x128xbf16>
    %cst_98 = arith.constant dense<0.000000e+00> : vector<8x8xf32>
    %241 = tpu.matmul %240, %239, %cst_98 {dimension_numbers = #tpu.dot_dimension_numbers<[1], [0], [0], [1], [0, 0, 1, 1], [], []>} : vector<8x128xbf16>, vector<128x8xbf16>, vector<8x8xf32> -> vector<8x8xf32>
    %242 = vector.extract_strided_slice %0 {offsets = [1, 0], sizes = [1, 8], strides = [1, 1]} : vector<2x8xf32> to vector<1x8xf32>
    %243 = vector.broadcast %242 : vector<1x8xf32> to vector<8x8xf32>
    %244 = arith.addf %241, %243 : vector<8x8xf32>
    %c0_99 = arith.constant 0 : index
    %c0_100 = arith.constant 0 : index
    %245 = vector.load %arg8[%c0_99, %c0_100] : memref<8x8xf32, #tpu.memory_space<vmem>>, vector<8x8xf32>
    tpu.vector_store %arg8[%c0_99, %c0_100], %244 {strides = array<i32>} : memref<8x8xf32, #tpu.memory_space<vmem>>, vector<8x8xf32>,
    return
  }
}

</mosaic_0001>

<llo_original>
// kernel: tpu_custom_call.1
$region0: #{tpu_custom_call.1}
  #allocation0 [shape = 'u32[]', space=smem, size = 0x4, offset = 0x4, fixed_abs, tag = 'smem constant byte address 0x4 - core index']
  #allocation1 [shape = 'u32[144,128]{1,0:T(1,128)}', space=vmem, size = 0x12000, scoped, tag = 'internal scratch']
  %s0 = inlined_call_operand.vmem [shape: f32[8,8], index: 0, kind: input, shape index: {}]
  %s1 = inlined_call_operand.vmem [shape: bf16[8,128], index: 1, kind: input, shape index: {}]
  %s2 = inlined_call_operand.hbm [shape: bf16[6,128,128], index: 2, kind: input, shape index: {}]
  %s3 = inlined_call_operand.vmem [shape: bf16[128,8], index: 3, kind: input, shape index: {}]
  %s4 = inlined_call_operand.vmem [shape: bf16[8,128], index: 4, kind: input, shape index: {}]
  %s5 = inlined_call_operand.vmem [shape: bf16[128,8], index: 5, kind: input, shape index: {}]
  %s6 = inlined_call_operand.vmem [shape: f32[2,8], index: 6, kind: input, shape index: {}]
  %s7 = inlined_call_operand.hbm [shape: f32[8,8], index: 7, kind: output, shape index: {0}]
  %s8 = inlined_call_operand.hbm [shape: f32[8,8], index: 8, kind: output, shape index: {1}]
  %9 = xla_tuple %s7, %s8
  %s10 = sld [smem:[#allocation0]]
  $region50: #{tpu_custom_call.1} parent=0
    _
  %s12 = ssub.s32 1, %s10
  %s13 = scalar_select 0, %s12, %s10
  $region1: #{tpu_custom_call.1} parent=0
    #allocation2 [shape = 'u8[196608]{0}', space=vmem, size = 0x30000, scoped, tag = 'input window, operand 2, single buffered']
    #allocation3 [shape = 's32[1]{0}', space=sflag, size = 0x4, scoped, tag = 'scoped memory for tpu_custom_call.1']
    #allocation4 [shape = 's32[1]{0}', space=sflag, size = 0x4, scoped, tag = 'scoped memory for tpu_custom_call.1']
    #allocation5 [shape = 'u8[4096]{0}', space=vmem, size = 0x1000, scoped, tag = 'output window, operand 0, single buffered']
    #allocation6 [shape = 'u8[4096]{0}', space=vmem, size = 0x1000, scoped, tag = 'output window, operand 1, single buffered']
    #allocation7 [shape = 's32[1]{0}', space=sflag, size = 0x4, scoped, tag = 'scoped memory for tpu_custom_call.1']
    %14 = vsyncpa [#allocation3], 0
    %15 = vsyncpa [#allocation4], 0
    %16 = vsyncpa [#allocation7], 0
    // Predicated region
    $region2: #{tpu_custom_call.1} parent=1 // pred_check
      _
    $region3: #{tpu_custom_call.1} parent=1 // pred_check_branch
      %18 = sbr.rel (0) target = $region5
    $region4: #{tpu_custom_call.1} parent=1 // pred_region
      _
    $region5: #{tpu_custom_call.1} parent=1 // pred_fallthru
      _
    // Predicated region
    $region6: #{tpu_custom_call.1} parent=1 // pred_check
      _
    $region7: #{tpu_custom_call.1} parent=1 // pred_check_branch
      %20 = sbr.rel (0) target = $region9
    $region8: #{tpu_custom_call.1} parent=1 // pred_region
      _
    $region9: #{tpu_custom_call.1} parent=1 // pred_fallthru
      _
    // Predicated region
    $region10: #{tpu_custom_call.1} parent=1 // pred_check
      _
    $region11: #{tpu_custom_call.1} parent=1 // pred_check_branch
      %22 = sbr.rel (0) target = $region13
    $region12: #{tpu_custom_call.1} parent=1 // pred_region
      %s24 = ssub.s32 6144, 6144
      %25 = vsyncadd [#allocation3], %s24
      %s26 = sshll.u32 [#allocation2], 4
      %s27 = int_to_ptr.vmem [resolvable:$true] %s26
      %32 = dma.hbm_to_vmem [thread:$0]  %s2, 6144, %s27, [#allocation3], 64, 64, 4
    $region13: #{tpu_custom_call.1} parent=1 // pred_fallthru
      _
    // Predicated region
    $region14: #{tpu_custom_call.1} parent=1 // pred_check
      _
    $region15: #{tpu_custom_call.1} parent=1 // pred_check_branch
      %34 = sbr.rel (0) target = $region17
    $region16: #{tpu_custom_call.1} parent=1 // pred_region
      _
    $region17: #{tpu_custom_call.1} parent=1 // pred_fallthru
      _
    // Predicated region
    $region18: #{tpu_custom_call.1} parent=1 // pred_check
      _
    $region19: #{tpu_custom_call.1} parent=1 // pred_check_branch
      %36 = sbr.rel (0) target = $region21
    $region20: #{tpu_custom_call.1} parent=1 // pred_region
      _
    $region21: #{tpu_custom_call.1} parent=1 // pred_fallthru
      _
    // Predicated region
    $region22: #{tpu_custom_call.1} parent=1 // pred_check
      _
    $region23: #{tpu_custom_call.1} parent=1 // pred_check_branch
      %38 = sbr.rel (0) target = $region25
    $region24: #{tpu_custom_call.1} parent=1 // pred_region
      _
    $region25: #{tpu_custom_call.1} parent=1 // pred_fallthru
      _
    // Predicated region
    $region26: #{tpu_custom_call.1} parent=1 // pred_check
      _
    $region27: #{tpu_custom_call.1} parent=1 // pred_check_branch
      %40 = sbr.rel (0) target = $region29
    $region28: #{tpu_custom_call.1} parent=1 // pred_region
      _
    $region29: #{tpu_custom_call.1} parent=1 // pred_fallthru
      _
    // Predicated region
    $region30: #{tpu_custom_call.1} parent=1 // pred_check
      _
    $region31: #{tpu_custom_call.1} parent=1 // pred_check_branch
      %42 = sbr.rel (0) target = $region33
    $region32: #{tpu_custom_call.1} parent=1 // pred_region
      %43 = dma.done [#allocation3], 6144
    $region33: #{tpu_custom_call.1} parent=1 // pred_fallthru
      _
    %v45 = vld [vmem:[%s6] sm:$0x3]
    %v46 = vld [vmem:[%s0] sm:$0xff]
    %v47 = vld [vmem:[%s1] sm:$0xf]
    %v48 = vpack.c.bf16 %v46, %v46
    %vm49 = vcmask 64512
    %v51 = vsel %vm49, %v48, 0
    %vm53 = vcmask 1043456
    %v55 = vsel %vm53, %v47, 0
    %57 = vmatprep.subr.bf16.mxu0 0
    %58 = vmatpush1.bf16.msra.mxu0 0
    %59 = vmatprep.subr.bf16.mxu0 0
    %60 = vmatpush1.bf16.msra.mxu0 0
    %61 = vmatprep.subr.bf16.mxu0 0
    %62 = vmatpush1.bf16.msra.mxu0 0
    %63 = vmatprep.subr.bf16.mxu0 0
    %64 = vmatpush1.bf16.msra.mxu0 0
    %65 = vmatprep.subr.bf16.mxu0 0
    %66 = vmatpush1.bf16.msra.mxu0 0
    %67 = vmatprep.subr.bf16.mxu0 0
    %68 = vmatpush1.bf16.msra.mxu0 0
    %69 = vmatprep.subr.bf16.mxu0 0
    %70 = vmatpush1.bf16.msra.mxu0 0
    %71 = vmatprep.subr.bf16.mxu0 0
    %72 = vmatpush1.bf16.msra.mxu0 %v55
    %73 = vmatprep.subr.bf16.mxu0 0
    %74 = vmatpush2.bf16.msra.mxu0 0
    %75 = vmatprep.subr.bf16.mxu0 0
    %76 = vmatpush2.bf16.msra.mxu0 0
    %77 = vmatprep.subr.bf16.mxu0 0
    %78 = vmatpush2.bf16.msra.mxu0 0
    %79 = vmatprep.subr.bf16.mxu0 0
    %80 = vmatpush2.bf16.msra.mxu0 0
    %81 = vmatprep.subr.bf16.mxu0 0
    %82 = vmatpush2.bf16.msra.mxu0 0
    %83 = vmatprep.subr.bf16.mxu0 0
    %84 = vmatpush2.bf16.msra.mxu0 0
    %85 = vmatprep.subr.bf16.mxu0 0
    %86 = vmatpush2.bf16.msra.mxu0 0
    %87 = vmatprep.subr.bf16.mxu0 0
    %88 = vmatpush2.bf16.msra.mxu0 0
    %89 = vmatprep.mubr.bf16.mxu0 0
    %90 = vmatmul.mubr.bf16.gmra.mxu0 %v51
    %v91 = vpop.f32.mrf.mxu0
    %v92 = vadd.f32 0.0, %v91
    %v93 = vpop.f32.mrf.mxu0
    %v94 = vpop.f32.mrf.mxu0
    %v95 = vpop.f32.mrf.mxu0
    %96 = vdwg.mxu0
    %v97 = vrot.slane %v92, 4
    %v98 = vadd.f32 %v92, %v97
    %v99 = vrot.slane %v98, 2
    %v100 = vadd.f32 %v98, %v99
    %v101 = vrot.slane %v100, 1
    %v102 = vadd.f32 %v100, %v101
    %v103 = vmul.f32 %v102, 0.125
    %v104 = vmul.f32 %v92, %v92
    %v105 = vrot.slane %v104, 4
    %v106 = vadd.f32 %v104, %v105
    %v107 = vrot.slane %v106, 2
    %v108 = vadd.f32 %v106, %v107
    %v109 = vrot.slane %v108, 1
    %v110 = vadd.f32 %v108, %v109
    %v111 = vmul.f32 %v110, 0.125
    %v112 = vmul.f32 %v103, %v103
    %v113 = vsub.f32 %v111, %v112
    %v114 = vmax.f32 %v113, 0.0
    %v115 = vadd.f32 %v114, 1e-05
    %v116 = vrsqrt.pop %v115
    %v117 = vsub.f32 0.0, %v103
    %v118 = vmul.f32 %v117, %v116
    %v119 = vmul.f32 %v92, %v116
    %v120 = vadd.f32 %v119, %v118
    %v121 = vmax.f32 %v120, 0.0
    %v122 = vld [vmem:[#allocation2] sm:$0xf]
    %v123 = vld [vmem:[#allocation2 + $0x4] sm:$0xf]
    %v124 = vld [vmem:[#allocation2 + $0x8] sm:$0xf]
    %v125 = vld [vmem:[#allocation2 + $0xc] sm:$0xf]
    %v126 = vld [vmem:[#allocation2 + $0x10] sm:$0xf]
    %v127 = vld [vmem:[#allocation2 + $0x14] sm:$0xf]
    %v128 = vld [vmem:[#allocation2 + $0x18] sm:$0xf]
    %v129 = vld [vmem:[#allocation2 + $0x1c] sm:$0xf]
    %v130 = vld [vmem:[#allocation2 + $0x20] sm:$0xf]
    %v131 = vld [vmem:[#allocation2 + $0x24] sm:$0xf]
    %v132 = vld [vmem:[#allocation2 + $0x28] sm:$0xf]
    %v133 = vld [vmem:[#allocation2 + $0x2c] sm:$0xf]
    %v134 = vld [vmem:[#allocation2 + $0x30] sm:$0xf]
    %v135 = vld [vmem:[#allocation2 + $0x34] sm:$0xf]
    %v136 = vld [vmem:[#allocation2 + $0x38] sm:$0xf]
    %v137 = vld [vmem:[#allocation2 + $0x3c] sm:$0xf]
    %v138 = vpack.c.bf16 %v121, %v121
    %v155 = vunpack.c.l.b16 %v122
    %v156 = vunpack.c.l.b16 %v123
    %v157 = vunpack.c.l.b16 %v124
    %v158 = vunpack.c.l.b16 %v125
    %v159 = vunpack.c.l.b16 %v126
    %v160 = vunpack.c.l.b16 %v127
    %v161 = vunpack.c.l.b16 %v128
    %v162 = vunpack.c.l.b16 %v129
    %v163 = vunpack.c.l.b16 %v130
    %v164 = vunpack.c.l.b16 %v131
    %v165 = vunpack.c.l.b16 %v132
    %v166 = vunpack.c.l.b16 %v133
    %v167 = vunpack.c.l.b16 %v134
    %v168 = vunpack.c.l.b16 %v135
    %v169 = vunpack.c.l.b16 %v136
    %v170 = vunpack.c.l.b16 %v137
    %v171 = vpack.c.b16 %v156, %v155
    %v172 = vpack.c.b16 %v158, %v157
    %v173 = vpack.c.b16 %v160, %v159
    %v174 = vpack.c.b16 %v162, %v161
    %v175 = vpack.c.b16 %v164, %v163
    %v176 = vpack.c.b16 %v166, %v165
    %v177 = vpack.c.b16 %v168, %v167
    %v178 = vpack.c.b16 %v170, %v169
    %187 = vmatprep.subr.bf16.mxu0 0
    %188 = vmatpush1.bf16.msra.mxu0 %v178
    %189 = vmatprep.subr.bf16.mxu0 0
    %190 = vmatpush1.bf16.msra.mxu0 %v177
    %191 = vmatprep.subr.bf16.mxu0 0
    %192 = vmatpush1.bf16.msra.mxu0 %v176
    %193 = vmatprep.subr.bf16.mxu0 0
    %194 = vmatpush1.bf16.msra.mxu0 %v175
    %195 = vmatprep.subr.bf16.mxu0 0
    %196 = vmatpush1.bf16.msra.mxu0 %v174
    %197 = vmatprep.subr.bf16.mxu0 0
    %198 = vmatpush1.bf16.msra.mxu0 %v173
    %199 = vmatprep.subr.bf16.mxu0 0
    %200 = vmatpush1.bf16.msra.mxu0 %v172
    %201 = vmatprep.subr.bf16.mxu0 0
    %202 = vmatpush1.bf16.msra.mxu0 %v171
    %203 = vmatprep.subr.bf16.mxu0 0
    %204 = vmatpush2.bf16.msra.mxu0 0
    %205 = vmatprep.subr.bf16.mxu0 0
    %206 = vmatpush2.bf16.msra.mxu0 0
    %207 = vmatprep.subr.bf16.mxu0 0
    %208 = vmatpush2.bf16.msra.mxu0 0
    %209 = vmatprep.subr.bf16.mxu0 0
    %210 = vmatpush2.bf16.msra.mxu0 0
    %211 = vmatprep.subr.bf16.mxu0 0
    %212 = vmatpush2.bf16.msra.mxu0 0
    %213 = vmatprep.subr.bf16.mxu0 0
    %214 = vmatpush2.bf16.msra.mxu0 0
    %215 = vmatprep.subr.bf16.mxu0 0
    %216 = vmatpush2.bf16.msra.mxu0 0
    %217 = vmatprep.subr.bf16.mxu0 0
    %218 = vmatpush2.bf16.msra.mxu0 0
    %219 = vmatprep.mubr.bf16.mxu0 0
    %220 = vmatmul.mubr.bf16.gmra.mxu0 %v138
    %v221 = vpop.f32.mrf.mxu0
    %v222 = vadd.f32 0.0, %v221
    %v223 = vpop.f32.mrf.mxu0
    %v224 = vpop.f32.mrf.mxu0
    %v225 = vpop.f32.mrf.mxu0
    %226 = vdwg.mxu0
    %v227 = vrot.slane %v222, 4
    %v228 = vadd.f32 %v222, %v227
    %v229 = vrot.slane %v228, 2
    %v230 = vadd.f32 %v228, %v229
    %v231 = vrot.slane %v230, 1
    %v232 = vadd.f32 %v230, %v231
    %v233 = vmul.f32 %v232, 0.125
    %v234 = vmul.f32 %v222, %v222
    %v235 = vrot.slane %v234, 4
    %v236 = vadd.f32 %v234, %v235
    %v237 = vrot.slane %v236, 2
    %v238 = vadd.f32 %v236, %v237
    %v239 = vrot.slane %v238, 1
    %v240 = vadd.f32 %v238, %v239
    %v241 = vmul.f32 %v240, 0.125
    %v242 = vmul.f32 %v233, %v233
    %v243 = vsub.f32 %v241, %v242
    %v244 = vmax.f32 %v243, 0.0
    %v245 = vadd.f32 %v244, 1e-05
    %v246 = vrsqrt.pop %v245
    %v247 = vsub.f32 0.0, %v233
    %v248 = vmul.f32 %v247, %v246
    %v249 = vmul.f32 %v222, %v246
    %v250 = vadd.f32 %v249, %v248
    %v251 = vmax.f32 %v250, 0.0
    %s252 = scalar_lea.vmem [#allocation2], 64
    %v253 = vld [vmem:[%s252] sm:$0xf]
    %v254 = vld [vmem:[%s252 + $0x4] sm:$0xf]
    %v255 = vld [vmem:[%s252 + $0x8] sm:$0xf]
    %v256 = vld [vmem:[%s252 + $0xc] sm:$0xf]
    %v257 = vld [vmem:[%s252 + $0x10] sm:$0xf]
    %v258 = vld [vmem:[%s252 + $0x14] sm:$0xf]
    %v259 = vld [vmem:[%s252 + $0x18] sm:$0xf]
    %v260 = vld [vmem:[%s252 + $0x1c] sm:$0xf]
    %v261 = vld [vmem:[%s252 + $0x20] sm:$0xf]
    %v262 = vld [vmem:[%s252 + $0x24] sm:$0xf]
    %v263 = vld [vmem:[%s252 + $0x28] sm:$0xf]
    %v264 = vld [vmem:[%s252 + $0x2c] sm:$0xf]
    %v265 = vld [vmem:[%s252 + $0x30] sm:$0xf]
    %v266 = vld [vmem:[%s252 + $0x34] sm:$0xf]
    %v267 = vld [vmem:[%s252 + $0x38] sm:$0xf]
    %v268 = vld [vmem:[%s252 + $0x3c] sm:$0xf]
    %v269 = vpack.c.bf16 %v251, %v251
    %v286 = vunpack.c.l.b16 %v253
    %v287 = vunpack.c.l.b16 %v254
    %v288 = vunpack.c.l.b16 %v255
    %v289 = vunpack.c.l.b16 %v256
    %v290 = vunpack.c.l.b16 %v257
    %v291 = vunpack.c.l.b16 %v258
    %v292 = vunpack.c.l.b16 %v259
    %v293 = vunpack.c.l.b16 %v260
    %v294 = vunpack.c.l.b16 %v261
    %v295 = vunpack.c.l.b16 %v262
    %v296 = vunpack.c.l.b16 %v263
    %v297 = vunpack.c.l.b16 %v264
    %v298 = vunpack.c.l.b16 %v265
    %v299 = vunpack.c.l.b16 %v266
    %v300 = vunpack.c.l.b16 %v267
    %v301 = vunpack.c.l.b16 %v268
    %v302 = vpack.c.b16 %v287, %v286
    %v303 = vpack.c.b16 %v289, %v288
    %v304 = vpack.c.b16 %v291, %v290
    %v305 = vpack.c.b16 %v293, %v292
    %v306 = vpack.c.b16 %v295, %v294
    %v307 = vpack.c.b16 %v297, %v296
    %v308 = vpack.c.b16 %v299, %v298
    %v309 = vpack.c.b16 %v301, %v300
    %318 = vmatprep.subr.bf16.mxu0 0
    %319 = vmatpush1.bf16.msra.mxu0 %v309
    %320 = vmatprep.subr.bf16.mxu0 0
    %321 = vmatpush1.bf16.msra.mxu0 %v308
    %322 = vmatprep.subr.bf16.mxu0 0
    %323 = vmatpush1.bf16.msra.mxu0 %v307
    %324 = vmatprep.subr.bf16.mxu0 0
    %325 = vmatpush1.bf16.msra.mxu0 %v306
    %326 = vmatprep.subr.bf16.mxu0 0
    %327 = vmatpush1.bf16.msra.mxu0 %v305
    %328 = vmatprep.subr.bf16.mxu0 0
    %329 = vmatpush1.bf16.msra.mxu0 %v304
    %330 = vmatprep.subr.bf16.mxu0 0
    %331 = vmatpush1.bf16.msra.mxu0 %v303
    %332 = vmatprep.subr.bf16.mxu0 0
    %333 = vmatpush1.bf16.msra.mxu0 %v302
    %334 = vmatprep.subr.bf16.mxu0 0
    %335 = vmatpush2.bf16.msra.mxu0 0
    %336 = vmatprep.subr.bf16.mxu0 0
    %337 = vmatpush2.bf16.msra.mxu0 0
    %338 = vmatprep.subr.bf16.mxu0 0
    %339 = vmatpush2.bf16.msra.mxu0 0
    %340 = vmatprep.subr.bf16.mxu0 0
    %341 = vmatpush2.bf16.msra.mxu0 0
    %342 = vmatprep.subr.bf16.mxu0 0
    %343 = vmatpush2.bf16.msra.mxu0 0
    %344 = vmatprep.subr.bf16.mxu0 0
    %345 = vmatpush2.bf16.msra.mxu0 0
    %346 = vmatprep.subr.bf16.mxu0 0
    %347 = vmatpush2.bf16.msra.mxu0 0
    %348 = vmatprep.subr.bf16.mxu0 0
    %349 = vmatpush2.bf16.msra.mxu0 0
    %350 = vmatprep.mubr.bf16.mxu0 0
    %351 = vmatmul.mubr.bf16.gmra.mxu0 %v269
    %v352 = vpop.f32.mrf.mxu0
    %v353 = vadd.f32 0.0, %v352
    %v354 = vpop.f32.mrf.mxu0
    %v355 = vpop.f32.mrf.mxu0
    %v356 = vpop.f32.mrf.mxu0
    %357 = vdwg.mxu0
    %v358 = vrot.slane %v353, 4
    %v359 = vadd.f32 %v353, %v358
    %v360 = vrot.slane %v359, 2
    %v361 = vadd.f32 %v359, %v360
    %v362 = vrot.slane %v361, 1
    %v363 = vadd.f32 %v361, %v362
    %v364 = vmul.f32 %v363, 0.125
    %v365 = vmul.f32 %v353, %v353
    %v366 = vrot.slane %v365, 4
    %v367 = vadd.f32 %v365, %v366
    %v368 = vrot.slane %v367, 2
    %v369 = vadd.f32 %v367, %v368
    %v370 = vrot.slane %v369, 1
    %v371 = vadd.f32 %v369, %v370
    %v372 = vmul.f32 %v371, 0.125
    %v373 = vmul.f32 %v364, %v364
    %v374 = vsub.f32 %v372, %v373
    %v375 = vmax.f32 %v374, 0.0
    %v376 = vadd.f32 %v375, 1e-05
    %v377 = vrsqrt.pop %v376
    %v378 = vsub.f32 0.0, %v364
    %v379 = vmul.f32 %v378, %v377
    %v380 = vmul.f32 %v353, %v377
    %v381 = vadd.f32 %v380, %v379
    %v382 = vmax.f32 %v381, 0.0
    %s383 = scalar_lea.vmem [#allocation2], 128
    %v384 = vld [vmem:[%s383] sm:$0xf]
    %v385 = vld [vmem:[%s383 + $0x4] sm:$0xf]
    %v386 = vld [vmem:[%s383 + $0x8] sm:$0xf]
    %v387 = vld [vmem:[%s383 + $0xc] sm:$0xf]
    %v388 = vld [vmem:[%s383 + $0x10] sm:$0xf]
    %v389 = vld [vmem:[%s383 + $0x14] sm:$0xf]
    %v390 = vld [vmem:[%s383 + $0x18] sm:$0xf]
    %v391 = vld [vmem:[%s383 + $0x1c] sm:$0xf]
    %v392 = vld [vmem:[%s383 + $0x20] sm:$0xf]
    %v393 = vld [vmem:[%s383 + $0x24] sm:$0xf]
    %v394 = vld [vmem:[%s383 + $0x28] sm:$0xf]
    %v395 = vld [vmem:[%s383 + $0x2c] sm:$0xf]
    %v396 = vld [vmem:[%s383 + $0x30] sm:$0xf]
    %v397 = vld [vmem:[%s383 + $0x34] sm:$0xf]
    %v398 = vld [vmem:[%s383 + $0x38] sm:$0xf]
    %v399 = vld [vmem:[%s383 + $0x3c] sm:$0xf]
    %v400 = vpack.c.bf16 %v382, %v382
    %v417 = vunpack.c.l.b16 %v384
    %v418 = vunpack.c.l.b16 %v385
    %v419 = vunpack.c.l.b16 %v386
    %v420 = vunpack.c.l.b16 %v387
    %v421 = vunpack.c.l.b16 %v388
    %v422 = vunpack.c.l.b16 %v389
    %v423 = vunpack.c.l.b16 %v390
    %v424 = vunpack.c.l.b16 %v391
    %v425 = vunpack.c.l.b16 %v392
    %v426 = vunpack.c.l.b16 %v393
    %v427 = vunpack.c.l.b16 %v394
    %v428 = vunpack.c.l.b16 %v395
    %v429 = vunpack.c.l.b16 %v396
    %v430 = vunpack.c.l.b16 %v397
    %v431 = vunpack.c.l.b16 %v398
    %v432 = vunpack.c.l.b16 %v399
    %v433 = vpack.c.b16 %v418, %v417
    %v434 = vpack.c.b16 %v420, %v419
    %v435 = vpack.c.b16 %v422, %v421
    %v436 = vpack.c.b16 %v424, %v423
    %v437 = vpack.c.b16 %v426, %v425
    %v438 = vpack.c.b16 %v428, %v427
    %v439 = vpack.c.b16 %v430, %v429
    %v440 = vpack.c.b16 %v432, %v431
    %449 = vmatprep.subr.bf16.mxu0 0
    %450 = vmatpush1.bf16.msra.mxu0 %v440
    %451 = vmatprep.subr.bf16.mxu0 0
    %452 = vmatpush1.bf16.msra.mxu0 %v439
    %453 = vmatprep.subr.bf16.mxu0 0
    %454 = vmatpush1.bf16.msra.mxu0 %v438
    %455 = vmatprep.subr.bf16.mxu0 0
    %456 = vmatpush1.bf16.msra.mxu0 %v437
    %457 = vmatprep.subr.bf16.mxu0 0
    %458 = vmatpush1.bf16.msra.mxu0 %v436
    %459 = vmatprep.subr.bf16.mxu0 0
    %460 = vmatpush1.bf16.msra.mxu0 %v435
    %461 = vmatprep.subr.bf16.mxu0 0
    %462 = vmatpush1.bf16.msra.mxu0 %v434
    %463 = vmatprep.subr.bf16.mxu0 0
    %464 = vmatpush1.bf16.msra.mxu0 %v433
    %465 = vmatprep.subr.bf16.mxu0 0
    %466 = vmatpush2.bf16.msra.mxu0 0
    %467 = vmatprep.subr.bf16.mxu0 0
    %468 = vmatpush2.bf16.msra.mxu0 0
    %469 = vmatprep.subr.bf16.mxu0 0
    %470 = vmatpush2.bf16.msra.mxu0 0
    %471 = vmatprep.subr.bf16.mxu0 0
    %472 = vmatpush2.bf16.msra.mxu0 0
    %473 = vmatprep.subr.bf16.mxu0 0
    %474 = vmatpush2.bf16.msra.mxu0 0
    %475 = vmatprep.subr.bf16.mxu0 0
    %476 = vmatpush2.bf16.msra.mxu0 0
    %477 = vmatprep.subr.bf16.mxu0 0
    %478 = vmatpush2.bf16.msra.mxu0 0
    %479 = vmatprep.subr.bf16.mxu0 0
    %480 = vmatpush2.bf16.msra.mxu0 0
    %481 = vmatprep.mubr.bf16.mxu0 0
    %482 = vmatmul.mubr.bf16.gmra.mxu0 %v400
    %v483 = vpop.f32.mrf.mxu0
    %v484 = vadd.f32 0.0, %v483
    %v485 = vpop.f32.mrf.mxu0
    %v486 = vpop.f32.mrf.mxu0
    %v487 = vpop.f32.mrf.mxu0
    %488 = vdwg.mxu0
    %v489 = vrot.slane %v484, 4
    %v490 = vadd.f32 %v484, %v489
    %v491 = vrot.slane %v490, 2
    %v492 = vadd.f32 %v490, %v491
    %v493 = vrot.slane %v492, 1
    %v494 = vadd.f32 %v492, %v493
    %v495 = vmul.f32 %v494, 0.125
    %v496 = vmul.f32 %v484, %v484
    %v497 = vrot.slane %v496, 4
    %v498 = vadd.f32 %v496, %v497
    %v499 = vrot.slane %v498, 2
    %v500 = vadd.f32 %v498, %v499
    %v501 = vrot.slane %v500, 1
    %v502 = vadd.f32 %v500, %v501
    %v503 = vmul.f32 %v502, 0.125
    %v504 = vmul.f32 %v495, %v495
    %v505 = vsub.f32 %v503, %v504
    %v506 = vmax.f32 %v505, 0.0
    %v507 = vadd.f32 %v506, 1e-05
    %v508 = vrsqrt.pop %v507
    %v509 = vsub.f32 0.0, %v495
    %v510 = vmul.f32 %v509, %v508
    %v511 = vmul.f32 %v484, %v508
    %v512 = vadd.f32 %v511, %v510
    %v513 = vmax.f32 %v512, 0.0
    %s514 = scalar_lea.vmem [#allocation2], 192
    %v515 = vld [vmem:[%s514] sm:$0xf]
    %v516 = vld [vmem:[%s514 + $0x4] sm:$0xf]
    %v517 = vld [vmem:[%s514 + $0x8] sm:$0xf]
    %v518 = vld [vmem:[%s514 + $0xc] sm:$0xf]
    %v519 = vld [vmem:[%s514 + $0x10] sm:$0xf]
    %v520 = vld [vmem:[%s514 + $0x14] sm:$0xf]
    %v521 = vld [vmem:[%s514 + $0x18] sm:$0xf]
    %v522 = vld [vmem:[%s514 + $0x1c] sm:$0xf]
    %v523 = vld [vmem:[%s514 + $0x20] sm:$0xf]
    %v524 = vld [vmem:[%s514 + $0x24] sm:$0xf]
    %v525 = vld [vmem:[%s514 + $0x28] sm:$0xf]
    %v526 = vld [vmem:[%s514 + $0x2c] sm:$0xf]
    %v527 = vld [vmem:[%s514 + $0x30] sm:$0xf]
    %v528 = vld [vmem:[%s514 + $0x34] sm:$0xf]
    %v529 = vld [vmem:[%s514 + $0x38] sm:$0xf]
    %v530 = vld [vmem:[%s514 + $0x3c] sm:$0xf]
    %v531 = vpack.c.bf16 %v513, %v513
    %v548 = vunpack.c.l.b16 %v515
    %v549 = vunpack.c.l.b16 %v516
    %v550 = vunpack.c.l.b16 %v517
    %v551 = vunpack.c.l.b16 %v518
    %v552 = vunpack.c.l.b16 %v519
    %v553 = vunpack.c.l.b16 %v520
    %v554 = vunpack.c.l.b16 %v521
    %v555 = vunpack.c.l.b16 %v522
    %v556 = vunpack.c.l.b16 %v523
    %v557 = vunpack.c.l.b16 %v524
    %v558 = vunpack.c.l.b16 %v525
    %v559 = vunpack.c.l.b16 %v526
    %v560 = vunpack.c.l.b16 %v527
    %v561 = vunpack.c.l.b16 %v528
    %v562 = vunpack.c.l.b16 %v529
    %v563 = vunpack.c.l.b16 %v530
    %v564 = vpack.c.b16 %v549, %v548
    %v565 = vpack.c.b16 %v551, %v550
    %v566 = vpack.c.b16 %v553, %v552
    %v567 = vpack.c.b16 %v555, %v554
    %v568 = vpack.c.b16 %v557, %v556
    %v569 = vpack.c.b16 %v559, %v558
    %v570 = vpack.c.b16 %v561, %v560
    %v571 = vpack.c.b16 %v563, %v562
    %580 = vmatprep.subr.bf16.mxu0 0
    %581 = vmatpush1.bf16.msra.mxu0 %v571
    %582 = vmatprep.subr.bf16.mxu0 0
    %583 = vmatpush1.bf16.msra.mxu0 %v570
    %584 = vmatprep.subr.bf16.mxu0 0
    %585 = vmatpush1.bf16.msra.mxu0 %v569
    %586 = vmatprep.subr.bf16.mxu0 0
    %587 = vmatpush1.bf16.msra.mxu0 %v568
    %588 = vmatprep.subr.bf16.mxu0 0
    %589 = vmatpush1.bf16.msra.mxu0 %v567
    %590 = vmatprep.subr.bf16.mxu0 0
    %591 = vmatpush1.bf16.msra.mxu0 %v566
    %592 = vmatprep.subr.bf16.mxu0 0
    %593 = vmatpush1.bf16.msra.mxu0 %v565
    %594 = vmatprep.subr.bf16.mxu0 0
    %595 = vmatpush1.bf16.msra.mxu0 %v564
    %596 = vmatprep.subr.bf16.mxu0 0
    %597 = vmatpush2.bf16.msra.mxu0 0
    %598 = vmatprep.subr.bf16.mxu0 0
    %599 = vmatpush2.bf16.msra.mxu0 0
    %600 = vmatprep.subr.bf16.mxu0 0
    %601 = vmatpush2.bf16.msra.mxu0 0
    %602 = vmatprep.subr.bf16.mxu0 0
    %603 = vmatpush2.bf16.msra.mxu0 0
    %604 = vmatprep.subr.bf16.mxu0 0
    %605 = vmatpush2.bf16.msra.mxu0 0
    %606 = vmatprep.subr.bf16.mxu0 0
    %607 = vmatpush2.bf16.msra.mxu0 0
    %608 = vmatprep.subr.bf16.mxu0 0
    %609 = vmatpush2.bf16.msra.mxu0 0
    %610 = vmatprep.subr.bf16.mxu0 0
    %611 = vmatpush2.bf16.msra.mxu0 0
    %612 = vmatprep.mubr.bf16.mxu0 0
    %613 = vmatmul.mubr.bf16.gmra.mxu0 %v531
    %v614 = vpop.f32.mrf.mxu0
    %v615 = vadd.f32 0.0, %v614
    %v616 = vpop.f32.mrf.mxu0
    %v617 = vpop.f32.mrf.mxu0
    %v618 = vpop.f32.mrf.mxu0
    %619 = vdwg.mxu0
    %v620 = vrot.slane %v615, 4
    %v621 = vadd.f32 %v615, %v620
    %v622 = vrot.slane %v621, 2
    %v623 = vadd.f32 %v621, %v622
    %v624 = vrot.slane %v623, 1
    %v625 = vadd.f32 %v623, %v624
    %v626 = vmul.f32 %v625, 0.125
    %v627 = vmul.f32 %v615, %v615
    %v628 = vrot.slane %v627, 4
    %v629 = vadd.f32 %v627, %v628
    %v630 = vrot.slane %v629, 2
    %v631 = vadd.f32 %v629, %v630
    %v632 = vrot.slane %v631, 1
    %v633 = vadd.f32 %v631, %v632
    %v634 = vmul.f32 %v633, 0.125
    %v635 = vmul.f32 %v626, %v626
    %v636 = vsub.f32 %v634, %v635
    %v637 = vmax.f32 %v636, 0.0
    %v638 = vadd.f32 %v637, 1e-05
    %v639 = vrsqrt.pop %v638
    %v640 = vsub.f32 0.0, %v626
    %v641 = vmul.f32 %v640, %v639
    %v642 = vmul.f32 %v615, %v639
    %v643 = vadd.f32 %v642, %v641
    %v644 = vmax.f32 %v643, 0.0
    %s645 = scalar_lea.vmem [#allocation2], 256
    %v646 = vld [vmem:[%s645] sm:$0xf]
    %v647 = vld [vmem:[%s645 + $0x4] sm:$0xf]
    %v648 = vld [vmem:[%s645 + $0x8] sm:$0xf]
    %v649 = vld [vmem:[%s645 + $0xc] sm:$0xf]
    %v650 = vld [vmem:[%s645 + $0x10] sm:$0xf]
    %v651 = vld [vmem:[%s645 + $0x14] sm:$0xf]
    %v652 = vld [vmem:[%s645 + $0x18] sm:$0xf]
    %v653 = vld [vmem:[%s645 + $0x1c] sm:$0xf]
    %v654 = vld [vmem:[%s645 + $0x20] sm:$0xf]
    %v655 = vld [vmem:[%s645 + $0x24] sm:$0xf]
    %v656 = vld [vmem:[%s645 + $0x28] sm:$0xf]
    %v657 = vld [vmem:[%s645 + $0x2c] sm:$0xf]
    %v658 = vld [vmem:[%s645 + $0x30] sm:$0xf]
    %v659 = vld [vmem:[%s645 + $0x34] sm:$0xf]
    %v660 = vld [vmem:[%s645 + $0x38] sm:$0xf]
    %v661 = vld [vmem:[%s645 + $0x3c] sm:$0xf]
    %v662 = vpack.c.bf16 %v644, %v644
    %v679 = vunpack.c.l.b16 %v646
    %v680 = vunpack.c.l.b16 %v647
    %v681 = vunpack.c.l.b16 %v648
    %v682 = vunpack.c.l.b16 %v649
    %v683 = vunpack.c.l.b16 %v650
    %v684 = vunpack.c.l.b16 %v651
    %v685 = vunpack.c.l.b16 %v652
    %v686 = vunpack.c.l.b16 %v653
    %v687 = vunpack.c.l.b16 %v654
    %v688 = vunpack.c.l.b16 %v655
    %v689 = vunpack.c.l.b16 %v656
    %v690 = vunpack.c.l.b16 %v657
    %v691 = vunpack.c.l.b16 %v658
    %v692 = vunpack.c.l.b16 %v659
    %v693 = vunpack.c.l.b16 %v660
    %v694 = vunpack.c.l.b16 %v661
    %v695 = vpack.c.b16 %v680, %v679
    %v696 = vpack.c.b16 %v682, %v681
    %v697 = vpack.c.b16 %v684, %v683
    %v698 = vpack.c.b16 %v686, %v685
    %v699 = vpack.c.b16 %v688, %v687
    %v700 = vpack.c.b16 %v690, %v689
    %v701 = vpack.c.b16 %v692, %v691
    %v702 = vpack.c.b16 %v694, %v693
    %711 = vmatprep.subr.bf16.mxu0 0
    %712 = vmatpush1.bf16.msra.mxu0 %v702
    %713 = vmatprep.subr.bf16.mxu0 0
    %714 = vmatpush1.bf16.msra.mxu0 %v701
    %715 = vmatprep.subr.bf16.mxu0 0
    %716 = vmatpush1.bf16.msra.mxu0 %v700
    %717 = vmatprep.subr.bf16.mxu0 0
    %718 = vmatpush1.bf16.msra.mxu0 %v699
    %719 = vmatprep.subr.bf16.mxu0 0
    %720 = vmatpush1.bf16.msra.mxu0 %v698
    %721 = vmatprep.subr.bf16.mxu0 0
    %722 = vmatpush1.bf16.msra.mxu0 %v697
    %723 = vmatprep.subr.bf16.mxu0 0
    %724 = vmatpush1.bf16.msra.mxu0 %v696
    %725 = vmatprep.subr.bf16.mxu0 0
    %726 = vmatpush1.bf16.msra.mxu0 %v695
    %727 = vmatprep.subr.bf16.mxu0 0
    %728 = vmatpush2.bf16.msra.mxu0 0
    %729 = vmatprep.subr.bf16.mxu0 0
    %730 = vmatpush2.bf16.msra.mxu0 0
    %731 = vmatprep.subr.bf16.mxu0 0
    %732 = vmatpush2.bf16.msra.mxu0 0
    %733 = vmatprep.subr.bf16.mxu0 0
    %734 = vmatpush2.bf16.msra.mxu0 0
    %735 = vmatprep.subr.bf16.mxu0 0
    %736 = vmatpush2.bf16.msra.mxu0 0
    %737 = vmatprep.subr.bf16.mxu0 0
    %738 = vmatpush2.bf16.msra.mxu0 0
    %739 = vmatprep.subr.bf16.mxu0 0
    %740 = vmatpush2.bf16.msra.mxu0 0
    %741 = vmatprep.subr.bf16.mxu0 0
    %742 = vmatpush2.bf16.msra.mxu0 0
    %743 = vmatprep.mubr.bf16.mxu0 0
    %744 = vmatmul.mubr.bf16.gmra.mxu0 %v662
    %v745 = vpop.f32.mrf.mxu0
    %v746 = vadd.f32 0.0, %v745
    %v747 = vpop.f32.mrf.mxu0
    %v748 = vpop.f32.mrf.mxu0
    %v749 = vpop.f32.mrf.mxu0
    %750 = vdwg.mxu0
    %v751 = vrot.slane %v746, 4
    %v752 = vadd.f32 %v746, %v751
    %v753 = vrot.slane %v752, 2
    %v754 = vadd.f32 %v752, %v753
    %v755 = vrot.slane %v754, 1
    %v756 = vadd.f32 %v754, %v755
    %v757 = vmul.f32 %v756, 0.125
    %v758 = vmul.f32 %v746, %v746
    %v759 = vrot.slane %v758, 4
    %v760 = vadd.f32 %v758, %v759
    %v761 = vrot.slane %v760, 2
    %v762 = vadd.f32 %v760, %v761
    %v763 = vrot.slane %v762, 1
    %v764 = vadd.f32 %v762, %v763
    %v765 = vmul.f32 %v764, 0.125
    %v766 = vmul.f32 %v757, %v757
    %v767 = vsub.f32 %v765, %v766
    %v768 = vmax.f32 %v767, 0.0
    %v769 = vadd.f32 %v768, 1e-05
    %v770 = vrsqrt.pop %v769
    %v771 = vsub.f32 0.0, %v757
    %v772 = vmul.f32 %v771, %v770
    %v773 = vmul.f32 %v746, %v770
    %v774 = vadd.f32 %v773, %v772
    %v775 = vmax.f32 %v774, 0.0
    %v776 = vld [vmem:[%s3] sm:$0xf]
    %v777 = vld [vmem:[%s3 + $0x4] sm:$0xf]
    %v778 = vld [vmem:[%s3 + $0x8] sm:$0xf]
    %v779 = vld [vmem:[%s3 + $0xc] sm:$0xf]
    %v780 = vld [vmem:[%s3 + $0x10] sm:$0xf]
    %v781 = vld [vmem:[%s3 + $0x14] sm:$0xf]
    %v782 = vld [vmem:[%s3 + $0x18] sm:$0xf]
    %v783 = vld [vmem:[%s3 + $0x1c] sm:$0xf]
    %v784 = vld [vmem:[%s3 + $0x20] sm:$0xf]
    %v785 = vld [vmem:[%s3 + $0x24] sm:$0xf]
    %v786 = vld [vmem:[%s3 + $0x28] sm:$0xf]
    %v787 = vld [vmem:[%s3 + $0x2c] sm:$0xf]
    %v788 = vld [vmem:[%s3 + $0x30] sm:$0xf]
    %v789 = vld [vmem:[%s3 + $0x34] sm:$0xf]
    %v790 = vld [vmem:[%s3 + $0x38] sm:$0xf]
    %v791 = vld [vmem:[%s3 + $0x3c] sm:$0xf]
    %v792 = vpack.c.bf16 %v775, %v775
    %v793 = vlaneseq
    %v794 = vshrl.u32 %v793, 7
    %v795 = vsub.s32 0, %v794
    %v796 = vrot.slane %v45, %v795
    %v813 = vunpack.c.l.b16 %v776
    %v814 = vunpack.c.l.b16 %v777
    %v815 = vunpack.c.l.b16 %v778
    %v816 = vunpack.c.l.b16 %v779
    %v817 = vunpack.c.l.b16 %v780
    %v818 = vunpack.c.l.b16 %v781
    %v819 = vunpack.c.l.b16 %v782
    %v820 = vunpack.c.l.b16 %v783
    %v821 = vunpack.c.l.b16 %v784
    %v822 = vunpack.c.l.b16 %v785
    %v823 = vunpack.c.l.b16 %v786
    %v824 = vunpack.c.l.b16 %v787
    %v825 = vunpack.c.l.b16 %v788
    %v826 = vunpack.c.l.b16 %v789
    %v827 = vunpack.c.l.b16 %v790
    %v828 = vunpack.c.l.b16 %v791
    %v829 = vpack.c.b16 %v814, %v813
    %v830 = vpack.c.b16 %v816, %v815
    %v831 = vpack.c.b16 %v818, %v817
    %v832 = vpack.c.b16 %v820, %v819
    %v833 = vpack.c.b16 %v822, %v821
    %v834 = vpack.c.b16 %v824, %v823
    %v835 = vpack.c.b16 %v826, %v825
    %v836 = vpack.c.b16 %v828, %v827
    %845 = vmatprep.subr.bf16.mxu0 0
    %846 = vmatpush1.bf16.msra.mxu0 %v836
    %847 = vmatprep.subr.bf16.mxu0 0
    %848 = vmatpush1.bf16.msra.mxu0 %v835
    %849 = vmatprep.subr.bf16.mxu0 0
    %850 = vmatpush1.bf16.msra.mxu0 %v834
    %851 = vmatprep.subr.bf16.mxu0 0
    %852 = vmatpush1.bf16.msra.mxu0 %v833
    %853 = vmatprep.subr.bf16.mxu0 0
    %854 = vmatpush1.bf16.msra.mxu0 %v832
    %855 = vmatprep.subr.bf16.mxu0 0
    %856 = vmatpush1.bf16.msra.mxu0 %v831
    %857 = vmatprep.subr.bf16.mxu0 0
    %858 = vmatpush1.bf16.msra.mxu0 %v830
    %859 = vmatprep.subr.bf16.mxu0 0
    %860 = vmatpush1.bf16.msra.mxu0 %v829
    %861 = vmatprep.subr.bf16.mxu0 0
    %862 = vmatpush2.bf16.msra.mxu0 0
    %863 = vmatprep.subr.bf16.mxu0 0
    %864 = vmatpush2.bf16.msra.mxu0 0
    %865 = vmatprep.subr.bf16.mxu0 0
    %866 = vmatpush2.bf16.msra.mxu0 0
    %867 = vmatprep.subr.bf16.mxu0 0
    %868 = vmatpush2.bf16.msra.mxu0 0
    %869 = vmatprep.subr.bf16.mxu0 0
    %870 = vmatpush2.bf16.msra.mxu0 0
    %871 = vmatprep.subr.bf16.mxu0 0
    %872 = vmatpush2.bf16.msra.mxu0 0
    %873 = vmatprep.subr.bf16.mxu0 0
    %874 = vmatpush2.bf16.msra.mxu0 0
    %875 = vmatprep.subr.bf16.mxu0 0
    %876 = vmatpush2.bf16.msra.mxu0 0
    %877 = vmatprep.mubr.bf16.mxu0 0
    %878 = vmatmul.mubr.bf16.gmra.mxu0 %v792
    %v879 = vpop.f32.mrf.mxu0
    %v880 = vadd.f32 %v796, %v879
    %v881 = vpop.f32.mrf.mxu0
    %v882 = vpop.f32.mrf.mxu0
    %v883 = vpop.f32.mrf.mxu0
    %884 = vdwg.mxu0
    %885 = vst.msk [vmem:[#allocation5] sm:$0xff] %vm49, %v880
    %v886 = vld [vmem:[%s4] sm:$0xf]
    %v887 = vpack.c.bf16 %v880, %v880
    %v889 = vsel %vm49, %v887, 0
    %v892 = vsel %vm53, %v886, 0
    %894 = vmatprep.subr.bf16.mxu0 0
    %895 = vmatpush1.bf16.msra.mxu0 0
    %896 = vmatprep.subr.bf16.mxu0 0
    %897 = vmatpush1.bf16.msra.mxu0 0
    %898 = vmatprep.subr.bf16.mxu0 0
    %899 = vmatpush1.bf16.msra.mxu0 0
    %900 = vmatprep.subr.bf16.mxu0 0
    %901 = vmatpush1.bf16.msra.mxu0 0
    %902 = vmatprep.subr.bf16.mxu0 0
    %903 = vmatpush1.bf16.msra.mxu0 0
    %904 = vmatprep.subr.bf16.mxu0 0
    %905 = vmatpush1.bf16.msra.mxu0 0
    %906 = vmatprep.subr.bf16.mxu0 0
    %907 = vmatpush1.bf16.msra.mxu0 0
    %908 = vmatprep.subr.bf16.mxu0 0
    %909 = vmatpush1.bf16.msra.mxu0 %v892
    %910 = vmatprep.subr.bf16.mxu0 0
    %911 = vmatpush2.bf16.msra.mxu0 0
    %912 = vmatprep.subr.bf16.mxu0 0
    %913 = vmatpush2.bf16.msra.mxu0 0
    %914 = vmatprep.subr.bf16.mxu0 0
    %915 = vmatpush2.bf16.msra.mxu0 0
    %916 = vmatprep.subr.bf16.mxu0 0
    %917 = vmatpush2.bf16.msra.mxu0 0
    %918 = vmatprep.subr.bf16.mxu0 0
    %919 = vmatpush2.bf16.msra.mxu0 0
    %920 = vmatprep.subr.bf16.mxu0 0
    %921 = vmatpush2.bf16.msra.mxu0 0
    %922 = vmatprep.subr.bf16.mxu0 0
    %923 = vmatpush2.bf16.msra.mxu0 0
    %924 = vmatprep.subr.bf16.mxu0 0
    %925 = vmatpush2.bf16.msra.mxu0 0
    %926 = vmatprep.mubr.bf16.mxu0 0
    %927 = vmatmul.mubr.bf16.gmra.mxu0 %v889
    %v928 = vpop.f32.mrf.mxu0
    %v929 = vadd.f32 0.0, %v928
    %v930 = vpop.f32.mrf.mxu0
    %v931 = vpop.f32.mrf.mxu0
    %v932 = vpop.f32.mrf.mxu0
    %933 = vdwg.mxu0
    %v934 = vrot.slane %v929, 4
    %v935 = vadd.f32 %v929, %v934
    %v936 = vrot.slane %v935, 2
    %v937 = vadd.f32 %v935, %v936
    %v938 = vrot.slane %v937, 1
    %v939 = vadd.f32 %v937, %v938
    %v940 = vmul.f32 %v939, 0.125
    %v941 = vmul.f32 %v929, %v929
    %v942 = vrot.slane %v941, 4
    %v943 = vadd.f32 %v941, %v942
    %v944 = vrot.slane %v943, 2
    %v945 = vadd.f32 %v943, %v944
    %v946 = vrot.slane %v945, 1
    %v947 = vadd.f32 %v945, %v946
    %v948 = vmul.f32 %v947, 0.125
    %v949 = vmul.f32 %v940, %v940
    %v950 = vsub.f32 %v948, %v949
    %v951 = vmax.f32 %v950, 0.0
    %v952 = vadd.f32 %v951, 1e-05
    %v953 = vrsqrt.pop %v952
    %v954 = vsub.f32 0.0, %v940
    %v955 = vmul.f32 %v954, %v953
    %v956 = vmul.f32 %v929, %v953
    %v957 = vadd.f32 %v956, %v955
    %v958 = vmax.f32 %v957, 0.0
    %s959 = scalar_lea.vmem [#allocation2], 320
    %v960 = vld [vmem:[%s959] sm:$0xf]
    %v961 = vld [vmem:[%s959 + $0x4] sm:$0xf]
    %v962 = vld [vmem:[%s959 + $0x8] sm:$0xf]
    %v963 = vld [vmem:[%s959 + $0xc] sm:$0xf]
    %v964 = vld [vmem:[%s959 + $0x10] sm:$0xf]
    %v965 = vld [vmem:[%s959 + $0x14] sm:$0xf]
    %v966 = vld [vmem:[%s959 + $0x18] sm:$0xf]
    %v967 = vld [vmem:[%s959 + $0x1c] sm:$0xf]
    %v968 = vld [vmem:[%s959 + $0x20] sm:$0xf]
    %v969 = vld [vmem:[%s959 + $0x24] sm:$0xf]
    %v970 = vld [vmem:[%s959 + $0x28] sm:$0xf]
    %v971 = vld [vmem:[%s959 + $0x2c] sm:$0xf]
    %v972 = vld [vmem:[%s959 + $0x30] sm:$0xf]
    %v973 = vld [vmem:[%s959 + $0x34] sm:$0xf]
    %v974 = vld [vmem:[%s959 + $0x38] sm:$0xf]
    %v975 = vld [vmem:[%s959 + $0x3c] sm:$0xf]
    %v976 = vpack.c.bf16 %v958, %v958
    %v993 = vunpack.c.l.b16 %v960
    %v994 = vunpack.c.l.b16 %v961
    %v995 = vunpack.c.l.b16 %v962
    %v996 = vunpack.c.l.b16 %v963
    %v997 = vunpack.c.l.b16 %v964
    %v998 = vunpack.c.l.b16 %v965
    %v999 = vunpack.c.l.b16 %v966
    %v1000 = vunpack.c.l.b16 %v967
    %v1001 = vunpack.c.l.b16 %v968
    %v1002 = vunpack.c.l.b16 %v969
    %v1003 = vunpack.c.l.b16 %v970
    %v1004 = vunpack.c.l.b16 %v971
    %v1005 = vunpack.c.l.b16 %v972
    %v1006 = vunpack.c.l.b16 %v973
    %v1007 = vunpack.c.l.b16 %v974
    %v1008 = vunpack.c.l.b16 %v975
    %v1009 = vpack.c.b16 %v994, %v993
    %v1010 = vpack.c.b16 %v996, %v995
    %v1011 = vpack.c.b16 %v998, %v997
    %v1012 = vpack.c.b16 %v1000, %v999
    %v1013 = vpack.c.b16 %v1002, %v1001
    %v1014 = vpack.c.b16 %v1004, %v1003
    %v1015 = vpack.c.b16 %v1006, %v1005
    %v1016 = vpack.c.b16 %v1008, %v1007
    %1025 = vmatprep.subr.bf16.mxu0 0
    %1026 = vmatpush1.bf16.msra.mxu0 %v1016
    %1027 = vmatprep.subr.bf16.mxu0 0
    %1028 = vmatpush1.bf16.msra.mxu0 %v1015
    %1029 = vmatprep.subr.bf16.mxu0 0
    %1030 = vmatpush1.bf16.msra.mxu0 %v1014
    %1031 = vmatprep.subr.bf16.mxu0 0
    %1032 = vmatpush1.bf16.msra.mxu0 %v1013
    %1033 = vmatprep.subr.bf16.mxu0 0
    %1034 = vmatpush1.bf16.msra.mxu0 %v1012
    %1035 = vmatprep.subr.bf16.mxu0 0
    %1036 = vmatpush1.bf16.msra.mxu0 %v1011
    %1037 = vmatprep.subr.bf16.mxu0 0
    %1038 = vmatpush1.bf16.msra.mxu0 %v1010
    %1039 = vmatprep.subr.bf16.mxu0 0
    %1040 = vmatpush1.bf16.msra.mxu0 %v1009
    %1041 = vmatprep.subr.bf16.mxu0 0
    %1042 = vmatpush2.bf16.msra.mxu0 0
    %1043 = vmatprep.subr.bf16.mxu0 0
    %1044 = vmatpush2.bf16.msra.mxu0 0
    %1045 = vmatprep.subr.bf16.mxu0 0
    %1046 = vmatpush2.bf16.msra.mxu0 0
    %1047 = vmatprep.subr.bf16.mxu0 0
    %1048 = vmatpush2.bf16.msra.mxu0 0
    %1049 = vmatprep.subr.bf16.mxu0 0
    %1050 = vmatpush2.bf16.msra.mxu0 0
    %1051 = vmatprep.subr.bf16.mxu0 0
    %1052 = vmatpush2.bf16.msra.mxu0 0
    %1053 = vmatprep.subr.bf16.mxu0 0
    %1054 = vmatpush2.bf16.msra.mxu0 0
    %1055 = vmatprep.subr.bf16.mxu0 0
    %1056 = vmatpush2.bf16.msra.mxu0 0
    %1057 = vmatprep.mubr.bf16.mxu0 0
    %1058 = vmatmul.mubr.bf16.gmra.mxu0 %v976
    %v1059 = vpop.f32.mrf.mxu0
    %v1060 = vadd.f32 0.0, %v1059
    %v1061 = vpop.f32.mrf.mxu0
    %v1062 = vpop.f32.mrf.mxu0
    %v1063 = vpop.f32.mrf.mxu0
    %1064 = vdwg.mxu0
    %v1065 = vrot.slane %v1060, 4
    %v1066 = vadd.f32 %v1060, %v1065
    %v1067 = vrot.slane %v1066, 2
    %v1068 = vadd.f32 %v1066, %v1067
    %v1069 = vrot.slane %v1068, 1
    %v1070 = vadd.f32 %v1068, %v1069
    %v1071 = vmul.f32 %v1070, 0.125
    %v1072 = vmul.f32 %v1060, %v1060
    %v1073 = vrot.slane %v1072, 4
    %v1074 = vadd.f32 %v1072, %v1073
    %v1075 = vrot.slane %v1074, 2
    %v1076 = vadd.f32 %v1074, %v1075
    %v1077 = vrot.slane %v1076, 1
    %v1078 = vadd.f32 %v1076, %v1077
    %v1079 = vmul.f32 %v1078, 0.125
    %v1080 = vmul.f32 %v1071, %v1071
    %v1081 = vsub.f32 %v1079, %v1080
    %v1082 = vmax.f32 %v1081, 0.0
    %v1083 = vadd.f32 %v1082, 1e-05
    %v1084 = vrsqrt.pop %v1083
    %v1085 = vsub.f32 0.0, %v1071
    %v1086 = vmul.f32 %v1085, %v1084
    %v1087 = vmul.f32 %v1060, %v1084
    %v1088 = vadd.f32 %v1087, %v1086
    %v1089 = vmax.f32 %v1088, 0.0
    %v1090 = vld [vmem:[%s5] sm:$0xf]
    %v1091 = vld [vmem:[%s5 + $0x4] sm:$0xf]
    %v1092 = vld [vmem:[%s5 + $0x8] sm:$0xf]
    %v1093 = vld [vmem:[%s5 + $0xc] sm:$0xf]
    %v1094 = vld [vmem:[%s5 + $0x10] sm:$0xf]
    %v1095 = vld [vmem:[%s5 + $0x14] sm:$0xf]
    %v1096 = vld [vmem:[%s5 + $0x18] sm:$0xf]
    %v1097 = vld [vmem:[%s5 + $0x1c] sm:$0xf]
    %v1098 = vld [vmem:[%s5 + $0x20] sm:$0xf]
    %v1099 = vld [vmem:[%s5 + $0x24] sm:$0xf]
    %v1100 = vld [vmem:[%s5 + $0x28] sm:$0xf]
    %v1101 = vld [vmem:[%s5 + $0x2c] sm:$0xf]
    %v1102 = vld [vmem:[%s5 + $0x30] sm:$0xf]
    %v1103 = vld [vmem:[%s5 + $0x34] sm:$0xf]
    %v1104 = vld [vmem:[%s5 + $0x38] sm:$0xf]
    %v1105 = vld [vmem:[%s5 + $0x3c] sm:$0xf]
    %v1106 = vpack.c.bf16 %v1089, %v1089
    %v1107 = vlaneseq
    %v1108 = vshrl.u32 %v1107, 7
    %v1109 = vsub.s32 1, %v1108
    %v1110 = vrot.slane %v45, %v1109
    %v1127 = vunpack.c.l.b16 %v1090
    %v1128 = vunpack.c.l.b16 %v1091
    %v1129 = vunpack.c.l.b16 %v1092
    %v1130 = vunpack.c.l.b16 %v1093
    %v1131 = vunpack.c.l.b16 %v1094
    %v1132 = vunpack.c.l.b16 %v1095
    %v1133 = vunpack.c.l.b16 %v1096
    %v1134 = vunpack.c.l.b16 %v1097
    %v1135 = vunpack.c.l.b16 %v1098
    %v1136 = vunpack.c.l.b16 %v1099
    %v1137 = vunpack.c.l.b16 %v1100
    %v1138 = vunpack.c.l.b16 %v1101
    %v1139 = vunpack.c.l.b16 %v1102
    %v1140 = vunpack.c.l.b16 %v1103
    %v1141 = vunpack.c.l.b16 %v1104
    %v1142 = vunpack.c.l.b16 %v1105
    %v1143 = vpack.c.b16 %v1128, %v1127
    %v1144 = vpack.c.b16 %v1130, %v1129
    %v1145 = vpack.c.b16 %v1132, %v1131
    %v1146 = vpack.c.b16 %v1134, %v1133
    %v1147 = vpack.c.b16 %v1136, %v1135
    %v1148 = vpack.c.b16 %v1138, %v1137
    %v1149 = vpack.c.b16 %v1140, %v1139
    %v1150 = vpack.c.b16 %v1142, %v1141
    %1159 = vmatprep.subr.bf16.mxu0 0
    %1160 = vmatpush1.bf16.msra.mxu0 %v1150
    %1161 = vmatprep.subr.bf16.mxu0 0
    %1162 = vmatpush1.bf16.msra.mxu0 %v1149
    %1163 = vmatprep.subr.bf16.mxu0 0
    %1164 = vmatpush1.bf16.msra.mxu0 %v1148
    %1165 = vmatprep.subr.bf16.mxu0 0
    %1166 = vmatpush1.bf16.msra.mxu0 %v1147
    %1167 = vmatprep.subr.bf16.mxu0 0
    %1168 = vmatpush1.bf16.msra.mxu0 %v1146
    %1169 = vmatprep.subr.bf16.mxu0 0
    %1170 = vmatpush1.bf16.msra.mxu0 %v1145
    %1171 = vmatprep.subr.bf16.mxu0 0
    %1172 = vmatpush1.bf16.msra.mxu0 %v1144
    %1173 = vmatprep.subr.bf16.mxu0 0
    %1174 = vmatpush1.bf16.msra.mxu0 %v1143
    %1175 = vmatprep.subr.bf16.mxu0 0
    %1176 = vmatpush2.bf16.msra.mxu0 0
    %1177 = vmatprep.subr.bf16.mxu0 0
    %1178 = vmatpush2.bf16.msra.mxu0 0
    %1179 = vmatprep.subr.bf16.mxu0 0
    %1180 = vmatpush2.bf16.msra.mxu0 0
    %1181 = vmatprep.subr.bf16.mxu0 0
    %1182 = vmatpush2.bf16.msra.mxu0 0
    %1183 = vmatprep.subr.bf16.mxu0 0
    %1184 = vmatpush2.bf16.msra.mxu0 0
    %1185 = vmatprep.subr.bf16.mxu0 0
    %1186 = vmatpush2.bf16.msra.mxu0 0
    %1187 = vmatprep.subr.bf16.mxu0 0
    %1188 = vmatpush2.bf16.msra.mxu0 0
    %1189 = vmatprep.subr.bf16.mxu0 0
    %1190 = vmatpush2.bf16.msra.mxu0 0
    %1191 = vmatprep.mubr.bf16.mxu0 0
    %1192 = vmatmul.mubr.bf16.gmra.mxu0 %v1106
    %v1193 = vpop.f32.mrf.mxu0
    %v1194 = vadd.f32 %v1110, %v1193
    %v1195 = vpop.f32.mrf.mxu0
    %v1196 = vpop.f32.mrf.mxu0
    %v1197 = vpop.f32.mrf.mxu0
    %1198 = vdwg.mxu0
    %1199 = vst.msk [vmem:[#allocation6] sm:$0xff] %vm49, %v1194
    // Predicated region
    $region34: #{tpu_custom_call.1} parent=1 // pred_check
      _
    $region35: #{tpu_custom_call.1} parent=1 // pred_check_branch
      %1201 = sbr.rel (0) target = $region37
    $region36: #{tpu_custom_call.1} parent=1 // pred_region
      %s1203 = ssub.s32 128, 128
      %1204 = vsyncadd [#allocation4], %s1203
      %s1206 = sshll.u32 [#allocation5], 4
      %s1207 = int_to_ptr.vmem [resolvable:$true] %s1206
      %1209 = dma.vmem_to_hbm [thread:$0]  %s1207, 128, %s7, [#allocation4]
    $region37: #{tpu_custom_call.1} parent=1 // pred_fallthru
      _
    // Predicated region
    $region38: #{tpu_custom_call.1} parent=1 // pred_check
      _
    $region39: #{tpu_custom_call.1} parent=1 // pred_check_branch
      %1211 = sbr.rel (0) target = $region41
    $region40: #{tpu_custom_call.1} parent=1 // pred_region
      %s1213 = ssub.s32 128, 128
      %1214 = vsyncadd [#allocation7], %s1213
      %s1216 = sshll.u32 [#allocation6], 4
      %s1217 = int_to_ptr.vmem [resolvable:$true] %s1216
      %1219 = dma.vmem_to_hbm [thread:$0]  %s1217, 128, %s8, [#allocation7]
    $region41: #{tpu_custom_call.1} parent=1 // pred_fallthru
      _
    // Predicated region
    $region42: #{tpu_custom_call.1} parent=1 // pred_check
      _
    $region43: #{tpu_custom_call.1} parent=1 // pred_check_branch
      %1221 = sbr.rel (0) target = $region45
    $region44: #{tpu_custom_call.1} parent=1 // pred_region
      %1222 = dma.done [#allocation4], 128
    $region45: #{tpu_custom_call.1} parent=1 // pred_fallthru
      _
    // Predicated region
    $region46: #{tpu_custom_call.1} parent=1 // pred_check
      _
    $region47: #{tpu_custom_call.1} parent=1 // pred_check_branch
      %1224 = sbr.rel (0) target = $region49
    $region48: #{tpu_custom_call.1} parent=1 // pred_region
      %1225 = dma.done [#allocation7], 128
    $region49: #{tpu_custom_call.1} parent=1 // pred_fallthru
      _
    %1226 = vsyncpa [#allocation3], 1
    %1227 = vsyncpa [#allocation4], 1
    %1228 = vsyncpa [#allocation7], 1

</llo_original>
